<compile_context>
chip_gen: v5e
topology: v5e:2x2
jax: 0.10.0
libtpu: 0.0.40
codegen_flags: <defaults>
</compile_context>

<pallas_src>
import functools

import jax
import jax.numpy as jnp
from jax import lax
from jax.experimental import pallas as pl
from jax.experimental.pallas import tpu as pltpu

_NEG = -1e30  # effectively -inf, but avoids inf-inf NaNs in the online max


def _supcon_tile_kernel(fq_ref, fk_ref, lab_col_ref, lab_row_ref, out_ref,
                        qs_ref, m_ref, l_ref, spos_ref, npos_ref, *,
                        batch, inv_temp, loss_scale):
    """One (q-tile, k-tile) step of the SupCon forward.

    fq_ref      : [tq, Dp] bf16   query-row feature tile
    fk_ref      : [tk, Dp] bf16   key-row feature tile
    lab_col_ref : [tq, 1]  int32  labels of the query rows
    lab_row_ref : [1, tk]  int32  labels of the key rows
    out_ref     : [tq, 1]  f32    per-row loss (written on last k tile)
    qs_ref      : [tq, Dp] bf16   scratch: query tile pre-scaled by 1/T
    m/l/spos/npos_ref : [tq, 1] f32 scratch accumulators
    """
    qi = pl.program_id(0)
    ki = pl.program_id(1)
    tq = fq_ref.shape[0]
    tk = fk_ref.shape[0]

    # ---- per-q-tile init on the first k tile --------------------------------
    @pl.when(ki == 0)
    def _():
        # Fold 1/temperature into the bf16 query operand once per q tile,
        # instead of scaling every [tq, tk] logits tile on the VPU.
        qs_ref[...] = (fq_ref[...].astype(jnp.float32) * inv_temp).astype(qs_ref.dtype)
        m_ref[...] = jnp.full(m_ref.shape, _NEG, jnp.float32)
        l_ref[...] = jnp.zeros(l_ref.shape, jnp.float32)
        spos_ref[...] = jnp.zeros(spos_ref.shape, jnp.float32)
        npos_ref[...] = jnp.zeros(npos_ref.shape, jnp.float32)

    # ---- similarity tile on the MXU: bf16 in, f32 accumulate, no transpose --
    sim = lax.dot_general(qs_ref[...], fk_ref[...],
                          dimension_numbers=(((1,), (1,)), ((), ())),
                          preferred_element_type=jnp.float32)       # [tq, tk]

    row_g = qi * tq + lax.broadcasted_iota(jnp.int32, (tq, tk), 0)
    col_g = ki * tk + lax.broadcasted_iota(jnp.int32, (tq, tk), 1)
    col_valid = col_g < batch                      # mask padded key columns
    off_diag = jnp.logical_and(col_valid, row_g != col_g)

    # ---- online log-sum-exp over off-diagonal valid columns -----------------
    m_prev = m_ref[...]
    tile_max = jnp.max(jnp.where(col_valid, sim, _NEG), axis=1, keepdims=True)
    m_new = jnp.maximum(m_prev, tile_max)
    alpha = jnp.exp(m_prev - m_new)
    p = jnp.where(off_diag, jnp.exp(sim - m_new), 0.0)
    l_ref[...] = alpha * l_ref[...] + jnp.sum(p, axis=1, keepdims=True)
    m_ref[...] = m_new

    # ---- positive-pair statistics (supcon mask = label equality) ------------
    pos = jnp.where(
        jnp.logical_and(off_diag, lab_col_ref[...] == lab_row_ref[...]),
        1.0, 0.0)
    spos_ref[...] += jnp.sum(pos * sim, axis=1, keepdims=True)
    npos_ref[...] += jnp.sum(pos, axis=1, keepdims=True)

    # ---- finalize on the last k tile ----------------------------------------
    @pl.when(ki == pl.num_programs(1) - 1)
    def _():
        row_ids = qi * tq + lax.broadcasted_iota(jnp.int32, (tq, 1), 0)
        row_valid = row_ids < batch
        # Padded rows use a dummy denominator (their output is zeroed below);
        # real rows with zero positives reproduce the PyTorch 0/0 -> NaN.
        denom = jnp.where(row_valid, npos_ref[...], 1.0)
        mean_pos = spos_ref[...] * pl.reciprocal(denom, approx=True)
        log_prob = mean_pos - m_ref[...] - jnp.log(l_ref[...])
        loss_rows = loss_scale * log_prob
        out_ref[...] = jnp.where(row_valid, loss_rows, 0.0)


def _round_up(x, m):
    return (x + m - 1) // m * m


def kernelized_supcon_loss(features, labels, *, temperature=0.07,
                           base_temperature=0.07, method="supcon"):
    """Pallas wrapper. features: [B, D] float; labels: [B] int. Returns scalar loss."""
    if method != "supcon":
        # TODO(synk): 'threshold'/'expw' need the user-supplied kernel(labels)
        # similarity mask from the PyTorch module; only method='supcon' is lowered.
        raise NotImplementedError("only method='supcon' is implemented")
    B, D = features.shape

    # Lane/sublane friendly zero-padding: full MXU feeds, unmasked vector loads.
    Dp = _round_up(max(D, 128), 128)
    Bp = _round_up(max(B, 128), 128)

    # 128-aligned tiles (v5e MXU friendly); double-buffered bf16 feature tiles
    # + one f32 [tq, tk] logits tile + accumulators stay far below the 32 MiB
    # scoped-VMEM default (and v7x's 64 MiB physical ceiling).
    # TODO(synk): chunk the D (contraction) dim for very large feature widths.
    tq = 256 if Bp % 256 == 0 else 128
    tk = 512 if Bp % 512 == 0 else (256 if Bp % 256 == 0 else 128)

    feats = jnp.pad(features.astype(jnp.bfloat16), ((0, Bp - B), (0, Dp - D)))
    lab = jnp.pad(labels.astype(jnp.int32), (0, Bp - B),
                  constant_values=jnp.iinfo(jnp.int32).min)
    lab_col = lab.reshape(Bp, 1)
    lab_row = lab.reshape(1, Bp)

    kernel = functools.partial(
        _supcon_tile_kernel,
        batch=B,
        inv_temp=float(1.0 / temperature),
        loss_scale=float(-(temperature / base_temperature)),
    )

    per_row = pl.pallas_call(
        kernel,
        out_shape=jax.ShapeDtypeStruct((Bp, 1), jnp.float32),
        grid_spec=pltpu.PrefetchScalarGridSpec(
            num_scalar_prefetch=0,
            grid=(Bp // tq, Bp // tk),
            in_specs=[
                pl.BlockSpec((tq, Dp), lambda qi, ki: (qi, 0)),   # query rows
                pl.BlockSpec((tk, Dp), lambda qi, ki: (ki, 0)),   # key rows
                pl.BlockSpec((tq, 1), lambda qi, ki: (qi, 0)),    # labels (col)
                pl.BlockSpec((1, tk), lambda qi, ki: (0, ki)),    # labels (row)
            ],
            out_specs=pl.BlockSpec((tq, 1), lambda qi, ki: (qi, 0)),
            scratch_shapes=[
                pltpu.VMEM((tq, Dp), jnp.bfloat16),   # 1/T-scaled query tile
                pltpu.VMEM((tq, 1), jnp.float32),     # running row max m
                pltpu.VMEM((tq, 1), jnp.float32),     # rescaled exp-sum l
                pltpu.VMEM((tq, 1), jnp.float32),     # sum(pos * sim)
                pltpu.VMEM((tq, 1), jnp.float32),     # sum(pos)
            ],
        ),
        compiler_params=pltpu.CompilerParams(
            dimension_semantics=("parallel", "arbitrary")),
    )(feats, feats, lab_col, lab_row)

    # Tiny epilogue (B floats): padded rows were zeroed in-kernel.
    return jnp.sum(per_row) / B


def _reference_loss(features, labels, *, temperature=0.07, base_temperature=0.07):
    """Pure-JAX reference mirroring the PyTorch forward (supcon) and the
    kernel's bf16 MXU operands (f32 accumulation)."""
    f32 = jnp.float32
    fb = features.astype(jnp.bfloat16).astype(f32)
    q = (fb * f32(1.0 / temperature)).astype(jnp.bfloat16).astype(f32)
    sim = q @ fb.T
    B = features.shape[0]
    mask = (labels[:, None] == labels[None, :]).astype(f32)
    inv_diag = 1.0 - jnp.eye(B, dtype=f32)
    logits = sim - jnp.max(sim, axis=1, keepdims=True)
    uniformity = jnp.log(jnp.sum(jnp.exp(logits) * inv_diag, axis=1, keepdims=True))
    pos = mask * inv_diag
    log_prob = (pos * (logits - uniformity)).sum(1) / pos.sum(1)
    loss = -(temperature / base_temperature) * log_prob
    return loss.mean()


if __name__ == "__main__":
    key = jax.random.PRNGKey(0)
    B, D = 8, 32
    features = jax.random.normal(key, (B, D), dtype=jnp.float32)
    # L2-normalize (typical SupCon input); deterministic labels with repeats so
    # every row has at least one positive (matches PyTorch's expected usage).
    features = features / jnp.linalg.norm(features, axis=1, keepdims=True)
    labels = jnp.array([0, 1, 0, 2, 1, 2, 0, 1], dtype=jnp.int32)

    loss = kernelized_supcon_loss(features, labels, temperature=0.07,
                                  base_temperature=0.07, method="supcon")
    loss = jax.block_until_ready(loss)

    ref = _reference_loss(features, labels, temperature=0.07,
                          base_temperature=0.07)
    # bf16 MXU operands + approx reciprocal on the positive-count divide ->
    # compare with a correspondingly loose (but still bug-catching) tolerance.
    assert jnp.allclose(loss, ref, rtol=2e-2, atol=2e-2), (loss, ref)

    print("KERNEL_OK")
</pallas_src>

<mosaic_0001>
module attributes {stable_mosaic.version = 11 : i64} {
  func.func @_supcon_tile_kernel(%arg0: i32, %arg1: i32, %arg2: memref<128x128xbf16, #tpu.memory_space<vmem>>, %arg3: memref<128x128xbf16, #tpu.memory_space<vmem>>, %arg4: memref<128x1xi32, #tpu.memory_space<vmem>>, %arg5: memref<1x128xi32, #tpu.memory_space<vmem>>, %arg6: memref<128x1xf32, #tpu.memory_space<vmem>>, %arg7: memref<128x128xbf16, #tpu.memory_space<vmem>>, %arg8: memref<128x1xf32, #tpu.memory_space<vmem>>, %arg9: memref<128x1xf32, #tpu.memory_space<vmem>>, %arg10: memref<128x1xf32, #tpu.memory_space<vmem>>, %arg11: memref<128x1xf32, #tpu.memory_space<vmem>>) attributes {dimension_semantics = [#tpu.dimension_semantics<parallel>, #tpu.dimension_semantics<arbitrary>], iteration_bounds = array<i64: 1, 1>, scalar_prefetch = 0 : i64, scratch_operands = 5 : i64, tpu.core_type = #tpu.core_type<tc>, window_params = [{transform_indices = @transform_0, window_bounds = array<i64: 128, 128>}, {transform_indices = @transform_1, window_bounds = array<i64: 128, 128>}, {transform_indices = @transform_2, window_bounds = array<i64: 128, 1>}, {transform_indices = @transform_3, window_bounds = array<i64: 1, 128>}, {transform_indices = @transform_4, window_bounds = array<i64: 128, 1>}]} {
    %c0_i32 = arith.constant 0 : i32
    %0 = arith.cmpi eq, %arg1, %c0_i32 : i32
    %1 = arith.extui %0 : i1 to i32
    %c0_i32_0 = arith.constant 0 : i32
    %2 = arith.cmpi ne, %1, %c0_i32_0 : i32
    scf.if %2 {
      %c0_35 = arith.constant 0 : index
      %c0_36 = arith.constant 0 : index
      %61 = vector.load %arg2[%c0_35, %c0_36] : memref<128x128xbf16, #tpu.memory_space<vmem>>, vector<128x128xbf16>
      %62 = arith.extf %61 : vector<128x128xbf16> to vector<128x128xf32>
      %cst_37 = arith.constant 14.2857141 : f32
      %63 = vector.broadcast %cst_37 : f32 to vector<128x128xf32>
      %64 = arith.mulf %62, %63 : vector<128x128xf32>
      %65 = arith.truncf %64 : vector<128x128xf32> to vector<128x128xbf16>
      %c0_38 = arith.constant 0 : index
      %c0_39 = arith.constant 0 : index
      %66 = vector.load %arg7[%c0_38, %c0_39] : memref<128x128xbf16, #tpu.memory_space<vmem>>, vector<128x128xbf16>
      tpu.vector_store %arg7[%c0_38, %c0_39], %65 {strides = array<i32>} : memref<128x128xbf16, #tpu.memory_space<vmem>>, vector<128x128xbf16>,
      %cst_40 = arith.constant -1.000000e+30 : f32
      %67 = vector.broadcast %cst_40 : f32 to vector<128x1xf32>
      %c0_41 = arith.constant 0 : index
      %c0_42 = arith.constant 0 : index
      %68 = vector.load %arg8[%c0_41, %c0_42] : memref<128x1xf32, #tpu.memory_space<vmem>>, vector<128x1xf32>
      tpu.vector_store %arg8[%c0_41, %c0_42], %67 {strides = array<i32>} : memref<128x1xf32, #tpu.memory_space<vmem>>, vector<128x1xf32>,
      %cst_43 = arith.constant 0.000000e+00 : f32
      %69 = vector.broadcast %cst_43 : f32 to vector<128x1xf32>
      %c0_44 = arith.constant 0 : index
      %c0_45 = arith.constant 0 : index
      %70 = vector.load %arg9[%c0_44, %c0_45] : memref<128x1xf32, #tpu.memory_space<vmem>>, vector<128x1xf32>
      tpu.vector_store %arg9[%c0_44, %c0_45], %69 {strides = array<i32>} : memref<128x1xf32, #tpu.memory_space<vmem>>, vector<128x1xf32>,
      %cst_46 = arith.constant 0.000000e+00 : f32
      %71 = vector.broadcast %cst_46 : f32 to vector<128x1xf32>
      %c0_47 = arith.constant 0 : index
      %c0_48 = arith.constant 0 : index
      %72 = vector.load %arg10[%c0_47, %c0_48] : memref<128x1xf32, #tpu.memory_space<vmem>>, vector<128x1xf32>
      tpu.vector_store %arg10[%c0_47, %c0_48], %71 {strides = array<i32>} : memref<128x1xf32, #tpu.memory_space<vmem>>, vector<128x1xf32>,
      %cst_49 = arith.constant 0.000000e+00 : f32
      %73 = vector.broadcast %cst_49 : f32 to vector<128x1xf32>
      %c0_50 = arith.constant 0 : index
      %c0_51 = arith.constant 0 : index
      %74 = vector.load %arg11[%c0_50, %c0_51] : memref<128x1xf32, #tpu.memory_space<vmem>>, vector<128x1xf32>
      tpu.vector_store %arg11[%c0_50, %c0_51], %73 {strides = array<i32>} : memref<128x1xf32, #tpu.memory_space<vmem>>, vector<128x1xf32>,
    } else {
    }
    %c0 = arith.constant 0 : index
    %c0_1 = arith.constant 0 : index
    %3 = vector.load %arg7[%c0, %c0_1] : memref<128x128xbf16, #tpu.memory_space<vmem>>, vector<128x128xbf16>
    %c0_2 = arith.constant 0 : index
    %c0_3 = arith.constant 0 : index
    %4 = vector.load %arg3[%c0_2, %c0_3] : memref<128x128xbf16, #tpu.memory_space<vmem>>, vector<128x128xbf16>
    %cst = arith.constant dense<0.000000e+00> : vector<128x128xf32>
    %5 = tpu.matmul %3, %4, %cst {dimension_numbers = #tpu.dot_dimension_numbers<[1], [1], [0], [0], [0, 0, 1, 0], [], []>} : vector<128x128xbf16>, vector<128x128xbf16>, vector<128x128xf32> -> vector<128x128xf32>
    %c128_i32 = arith.constant 128 : i32
    %6 = arith.muli %arg0, %c128_i32 : i32
    %7 = tpu.iota {dimensions = array<i32: 0>} : vector<128x128xi32>
    %8 = vector.broadcast %6 : i32 to vector<128x128xi32>
    %9 = arith.addi %8, %7 : vector<128x128xi32>
    %c128_i32_4 = arith.constant 128 : i32
    %10 = arith.muli %arg1, %c128_i32_4 : i32
    %11 = tpu.iota {dimensions = array<i32: 1>} : vector<128x128xi32>
    %12 = vector.broadcast %10 : i32 to vector<128x128xi32>
    %13 = arith.addi %12, %11 : vector<128x128xi32>
    %c8_i32 = arith.constant 8 : i32
    %14 = vector.broadcast %c8_i32 : i32 to vector<128x128xi32>
    %15 = arith.cmpi slt, %13, %14 : vector<128x128xi32>
    %16 = arith.cmpi ne, %9, %13 : vector<128x128xi32>
    %17 = arith.andi %15, %16 : vector<128x128xi1>
    %c0_5 = arith.constant 0 : index
    %c0_6 = arith.constant 0 : index
    %18 = vector.load %arg8[%c0_5, %c0_6] : memref<128x1xf32, #tpu.memory_space<vmem>>, vector<128x1xf32>
    %cst_7 = arith.constant -1.000000e+30 : f32
    %19 = vector.broadcast %cst_7 : f32 to vector<128x128xf32>
    %20 = arith.select %15, %5, %19 : vector<128x128xi1>, vector<128x128xf32>
    %cst_8 = arith.constant dense<0xFF800000> : vector<128xf32>
    %21 = vector.multi_reduction <maximumf>, %20, %cst_8 [1] : vector<128x128xf32> to vector<128xf32>
    %22 = vector.shape_cast %21 : vector<128xf32> to vector<128x1xf32>
    %23 = arith.maximumf %18, %22 : vector<128x1xf32>
    %24 = arith.subf %18, %23 : vector<128x1xf32>
    %25 = math.exp %24 : vector<128x1xf32>
    %26 = vector.broadcast %23 : vector<128x1xf32> to vector<128x128xf32>
    %27 = arith.subf %5, %26 : vector<128x128xf32>
    %28 = math.exp %27 : vector<128x128xf32>
    %cst_9 = arith.constant 0.000000e+00 : f32
    %29 = vector.broadcast %cst_9 : f32 to vector<128x128xf32>
    %30 = arith.select %17, %28, %29 : vector<128x128xi1>, vector<128x128xf32>
    %c0_10 = arith.constant 0 : index
    %c0_11 = arith.constant 0 : index
    %31 = vector.load %arg9[%c0_10, %c0_11] : memref<128x1xf32, #tpu.memory_space<vmem>>, vector<128x1xf32>
    %32 = arith.mulf %25, %31 : vector<128x1xf32>
    %cst_12 = arith.constant dense<0.000000e+00> : vector<128xf32>
    %33 = vector.multi_reduction <add>, %30, %cst_12 [1] : vector<128x128xf32> to vector<128xf32>
    %34 = vector.shape_cast %33 : vector<128xf32> to vector<128x1xf32>
    %35 = arith.addf %32, %34 : vector<128x1xf32>
    %c0_13 = arith.constant 0 : index
    %c0_14 = arith.constant 0 : index
    %36 = vector.load %arg9[%c0_13, %c0_14] : memref<128x1xf32, #tpu.memory_space<vmem>>, vector<128x1xf32>
    tpu.vector_store %arg9[%c0_13, %c0_14], %35 {strides = array<i32>} : memref<128x1xf32, #tpu.memory_space<vmem>>, vector<128x1xf32>,
    %c0_15 = arith.constant 0 : index
    %c0_16 = arith.constant 0 : index
    %37 = vector.load %arg8[%c0_15, %c0_16] : memref<128x1xf32, #tpu.memory_space<vmem>>, vector<128x1xf32>
    tpu.vector_store %arg8[%c0_15, %c0_16], %23 {strides = array<i32>} : memref<128x1xf32, #tpu.memory_space<vmem>>, vector<128x1xf32>,
    %c0_17 = arith.constant 0 : index
    %c0_18 = arith.constant 0 : index
    %38 = vector.load %arg4[%c0_17, %c0_18] : memref<128x1xi32, #tpu.memory_space<vmem>>, vector<128x1xi32>
    %c0_19 = arith.constant 0 : index
    %c0_20 = arith.constant 0 : index
    %39 = vector.load %arg5[%c0_19, %c0_20] : memref<1x128xi32, #tpu.memory_space<vmem>>, vector<1x128xi32>
    %40 = vector.broadcast %38 : vector<128x1xi32> to vector<128x128xi32>
    %41 = vector.broadcast %39 : vector<1x128xi32> to vector<128x128xi32>
    %42 = arith.cmpi eq, %40, %41 : vector<128x128xi32>
    %43 = arith.andi %17, %42 : vector<128x128xi1>
    %cst_21 = arith.constant 1.000000e+00 : f32
    %cst_22 = arith.constant 0.000000e+00 : f32
    %44 = vector.broadcast %cst_21 : f32 to vector<128x128xf32>
    %45 = vector.broadcast %cst_22 : f32 to vector<128x128xf32>
    %46 = arith.select %43, %44, %45 : vector<128x128xi1>, vector<128x128xf32>
    %c0_23 = arith.constant 0 : index
    %c0_24 = arith.constant 0 : index
    %47 = vector.load %arg10[%c0_23, %c0_24] : memref<128x1xf32, #tpu.memory_space<vmem>>, vector<128x1xf32>
    %48 = arith.mulf %46, %5 : vector<128x128xf32>
    %cst_25 = arith.constant dense<0.000000e+00> : vector<128xf32>
    %49 = vector.multi_reduction <add>, %48, %cst_25 [1] : vector<128x128xf32> to vector<128xf32>
    %50 = vector.shape_cast %49 : vector<128xf32> to vector<128x1xf32>
    %51 = arith.addf %47, %50 : vector<128x1xf32>
    %c0_26 = arith.constant 0 : index
    %c0_27 = arith.constant 0 : index
    %52 = vector.load %arg10[%c0_26, %c0_27] : memref<128x1xf32, #tpu.memory_space<vmem>>, vector<128x1xf32>
    tpu.vector_store %arg10[%c0_26, %c0_27], %51 {strides = array<i32>} : memref<128x1xf32, #tpu.memory_space<vmem>>, vector<128x1xf32>,
    %c0_28 = arith.constant 0 : index
    %c0_29 = arith.constant 0 : index
    %53 = vector.load %arg11[%c0_28, %c0_29] : memref<128x1xf32, #tpu.memory_space<vmem>>, vector<128x1xf32>
    %cst_30 = arith.constant dense<0.000000e+00> : vector<128xf32>
    %54 = vector.multi_reduction <add>, %46, %cst_30 [1] : vector<128x128xf32> to vector<128xf32>
    %55 = vector.shape_cast %54 : vector<128xf32> to vector<128x1xf32>
    %56 = arith.addf %53, %55 : vector<128x1xf32>
    %c0_31 = arith.constant 0 : index
    %c0_32 = arith.constant 0 : index
    %57 = vector.load %arg11[%c0_31, %c0_32] : memref<128x1xf32, #tpu.memory_space<vmem>>, vector<128x1xf32>
    tpu.vector_store %arg11[%c0_31, %c0_32], %56 {strides = array<i32>} : memref<128x1xf32, #tpu.memory_space<vmem>>, vector<128x1xf32>,
    %c0_i32_33 = arith.constant 0 : i32
    %58 = arith.cmpi eq, %arg1, %c0_i32_33 : i32
    %59 = arith.extui %58 : i1 to i32
    %c0_i32_34 = arith.constant 0 : i32
    %60 = arith.cmpi ne, %59, %c0_i32_34 : i32
    scf.if %60 {
      %c128_i32_35 = arith.constant 128 : i32
      %61 = arith.muli %arg0, %c128_i32_35 : i32
      %62 = tpu.iota {dimensions = array<i32: 0>} : vector<128x1xi32>
      %63 = vector.broadcast %61 : i32 to vector<128x1xi32>
      %64 = arith.addi %63, %62 : vector<128x1xi32>
      %c8_i32_36 = arith.constant 8 : i32
      %65 = vector.broadcast %c8_i32_36 : i32 to vector<128x1xi32>
      %66 = arith.cmpi slt, %64, %65 : vector<128x1xi32>
      %c0_37 = arith.constant 0 : index
      %c0_38 = arith.constant 0 : index
      %67 = vector.load %arg11[%c0_37, %c0_38] : memref<128x1xf32, #tpu.memory_space<vmem>>, vector<128x1xf32>
      %cst_39 = arith.constant 1.000000e+00 : f32
      %68 = vector.broadcast %cst_39 : f32 to vector<128x1xf32>
      %69 = arith.select %66, %67, %68 : vector<128x1xi1>, vector<128x1xf32>
      %c0_40 = arith.constant 0 : index
      %c0_41 = arith.constant 0 : index
      %70 = vector.load %arg10[%c0_40, %c0_41] : memref<128x1xf32, #tpu.memory_space<vmem>>, vector<128x1xf32>
      %71 = tpu.reciprocal %69 {approx = true} : vector<128x1xf32> -> vector<128x1xf32>
      %72 = arith.mulf %70, %71 : vector<128x1xf32>
      %c0_42 = arith.constant 0 : index
      %c0_43 = arith.constant 0 : index
      %73 = vector.load %arg8[%c0_42, %c0_43] : memref<128x1xf32, #tpu.memory_space<vmem>>, vector<128x1xf32>
      %74 = arith.subf %72, %73 : vector<128x1xf32>
      %c0_44 = arith.constant 0 : index
      %c0_45 = arith.constant 0 : index
      %75 = vector.load %arg9[%c0_44, %c0_45] : memref<128x1xf32, #tpu.memory_space<vmem>>, vector<128x1xf32>
      %76 = math.log %75 : vector<128x1xf32>
      %77 = arith.subf %74, %76 : vector<128x1xf32>
      %cst_46 = arith.constant -1.000000e+00 : f32
      %78 = vector.broadcast %cst_46 : f32 to vector<128x1xf32>
      %79 = arith.mulf %78, %77 : vector<128x1xf32>
      %cst_47 = arith.constant 0.000000e+00 : f32
      %80 = vector.broadcast %cst_47 : f32 to vector<128x1xf32>
      %81 = arith.select %66, %79, %80 : vector<128x1xi1>, vector<128x1xf32>
      %c0_48 = arith.constant 0 : index
      %c0_49 = arith.constant 0 : index
      %82 = vector.load %arg6[%c0_48, %c0_49] : memref<128x1xf32, #tpu.memory_space<vmem>>, vector<128x1xf32>
      tpu.vector_store %arg6[%c0_48, %c0_49], %81 {strides = array<i32>} : memref<128x1xf32, #tpu.memory_space<vmem>>, vector<128x1xf32>,
    } else {
    }
    return
  }
  func.func @transform_0(%arg0: i32, %arg1: i32) -> (i32, i32) {
    %c0_i32 = arith.constant 0 : i32
    %c0_i32_0 = arith.constant 0 : i32
    return %arg0, %c0_i32 : i32, i32
  }
  func.func @transform_1(%arg0: i32, %arg1: i32) -> (i32, i32) {
    %c0_i32 = arith.constant 0 : i32
    %c0_i32_0 = arith.constant 0 : i32
    return %arg1, %c0_i32 : i32, i32
  }
  func.func @transform_2(%arg0: i32, %arg1: i32) -> (i32, i32) {
    %c0_i32 = arith.constant 0 : i32
    %c0_i32_0 = arith.constant 0 : i32
    return %arg0, %c0_i32 : i32, i32
  }
  func.func @transform_3(%arg0: i32, %arg1: i32) -> (i32, i32) {
    %c0_i32 = arith.constant 0 : i32
    %c0_i32_0 = arith.constant 0 : i32
    return %c0_i32, %arg1 : i32, i32
  }
  func.func @transform_4(%arg0: i32, %arg1: i32) -> (i32, i32) {
    %c0_i32 = arith.constant 0 : i32
    %c0_i32_0 = arith.constant 0 : i32
    return %arg0, %c0_i32 : i32, i32
  }
}

</mosaic_0001>

<llo_original>
// kernel: tpu_custom_call.1
$region0: #{tpu_custom_call.1}
  #allocation0 [shape = 'u32[]', space=smem, size = 0x4, offset = 0x4, fixed_abs, tag = 'smem constant byte address 0x4 - core index']
  #allocation1 [shape = 'u32[72,128]{1,0:T(1,128)}', space=vmem, size = 0x9000, scoped, tag = 'internal scratch']
  #allocation2 [shape = 'bf16[128,128]{1,0:T(8,128)(2,1)}', space=vmem, size = 0x8000, scoped, tag = 'scratch operand']
  #allocation3 [shape = 'f32[128,1]{1,0:T(8,128)}', space=vmem, size = 0x10000, scoped, tag = 'scratch operand']
  #allocation4 [shape = 'f32[128,1]{1,0:T(8,128)}', space=vmem, size = 0x10000, scoped, tag = 'scratch operand']
  #allocation5 [shape = 'f32[128,1]{1,0:T(8,128)}', space=vmem, size = 0x10000, scoped, tag = 'scratch operand']
  #allocation6 [shape = 'f32[128,1]{1,0:T(8,128)}', space=vmem, size = 0x10000, scoped, tag = 'scratch operand']
  %s0 = inlined_call_operand.vmem [shape: bf16[128,128], index: 0, kind: input, shape index: {}]
  %s1 = inlined_call_operand.vmem [shape: bf16[128,128], index: 1, kind: input, shape index: {}]
  %s2 = inlined_call_operand.vmem [shape: s32[128,1], index: 2, kind: input, shape index: {}]
  %s3 = inlined_call_operand.vmem [shape: s32[1,128], index: 3, kind: input, shape index: {}]
  %s4 = inlined_call_operand.vmem [shape: f32[128,1], index: 4, kind: output, shape index: {}]
  %s5 = sld [smem:[#allocation0]]
  $region34: #{tpu_custom_call.1} parent=0
    _
  %s7 = ssub.s32 1, %s5
  %s8 = scalar_select 0, %s7, %s5
  // Predicated region
  $region2: #{tpu_custom_call.1} parent=0 // pred_check
    _
  $region3: #{tpu_custom_call.1} parent=0 // pred_check_branch
    %10 = sbr.rel (0) target = $region5
  $region4: #{tpu_custom_call.1} parent=0 // pred_region
    _
  $region5: #{tpu_custom_call.1} parent=0 // pred_fallthru
    _
  // Predicated region
  $region6: #{tpu_custom_call.1} parent=0 // pred_check
    _
  $region7: #{tpu_custom_call.1} parent=0 // pred_check_branch
    %12 = sbr.rel (0) target = $region9
  $region8: #{tpu_custom_call.1} parent=0 // pred_region
    _
  $region9: #{tpu_custom_call.1} parent=0 // pred_fallthru
    _
  // Predicated region
  $region10: #{tpu_custom_call.1} parent=0 // pred_check
    _
  $region11: #{tpu_custom_call.1} parent=0 // pred_check_branch
    %14 = sbr.rel (0) target = $region13
  $region12: #{tpu_custom_call.1} parent=0 // pred_region
    _
  $region13: #{tpu_custom_call.1} parent=0 // pred_fallthru
    _
  // Predicated region
  $region14: #{tpu_custom_call.1} parent=0 // pred_check
    _
  $region15: #{tpu_custom_call.1} parent=0 // pred_check_branch
    %16 = sbr.rel (0) target = $region17
  $region16: #{tpu_custom_call.1} parent=0 // pred_region
    _
  $region17: #{tpu_custom_call.1} parent=0 // pred_fallthru
    _
  %p17 = scmp.eq.s32.totalorder 0, 0
  // Predicated region
  $region18: #{tpu_custom_call.1} parent=0 // pred_check
    %p18 = pneg %p17
  $region19: #{tpu_custom_call.1} parent=0 // pred_check_branch
    %20 = sbr.rel (%p18) target = $region21
  $region20: #{tpu_custom_call.1} parent=0 // pred_region
    %v21 = vld [vmem:[%s0] sm:$0xf]
    %v22 = vld [vmem:[%s0 + $0x4] sm:$0xf]
    %v23 = vld [vmem:[%s0 + $0x8] sm:$0xf]
    %v24 = vld [vmem:[%s0 + $0xc] sm:$0xf]
    %v25 = vld [vmem:[%s0 + $0x10] sm:$0xf]
    %v26 = vld [vmem:[%s0 + $0x14] sm:$0xf]
    %v27 = vld [vmem:[%s0 + $0x18] sm:$0xf]
    %v28 = vld [vmem:[%s0 + $0x1c] sm:$0xf]
    %v29 = vld [vmem:[%s0 + $0x20] sm:$0xf]
    %v30 = vld [vmem:[%s0 + $0x24] sm:$0xf]
    %v31 = vld [vmem:[%s0 + $0x28] sm:$0xf]
    %v32 = vld [vmem:[%s0 + $0x2c] sm:$0xf]
    %v33 = vld [vmem:[%s0 + $0x30] sm:$0xf]
    %v34 = vld [vmem:[%s0 + $0x34] sm:$0xf]
    %v35 = vld [vmem:[%s0 + $0x38] sm:$0xf]
    %v36 = vld [vmem:[%s0 + $0x3c] sm:$0xf]
    %v37 = vunpack.c.l.bf16 %v21
    %v38 = vunpack.c.l.bf16 %v22
    %v39 = vunpack.c.l.bf16 %v23
    %v40 = vunpack.c.l.bf16 %v24
    %v41 = vunpack.c.l.bf16 %v25
    %v42 = vunpack.c.l.bf16 %v26
    %v43 = vunpack.c.l.bf16 %v27
    %v44 = vunpack.c.l.bf16 %v28
    %v45 = vunpack.c.l.bf16 %v29
    %v46 = vunpack.c.l.bf16 %v30
    %v47 = vunpack.c.l.bf16 %v31
    %v48 = vunpack.c.l.bf16 %v32
    %v49 = vunpack.c.l.bf16 %v33
    %v50 = vunpack.c.l.bf16 %v34
    %v51 = vunpack.c.l.bf16 %v35
    %v52 = vunpack.c.l.bf16 %v36
    %v53 = vmul.f32 %v37, 14.285714
    %v54 = vmul.f32 %v38, 14.285714
    %v55 = vmul.f32 %v39, 14.285714
    %v56 = vmul.f32 %v40, 14.285714
    %v57 = vmul.f32 %v41, 14.285714
    %v58 = vmul.f32 %v42, 14.285714
    %v59 = vmul.f32 %v43, 14.285714
    %v60 = vmul.f32 %v44, 14.285714
    %v61 = vmul.f32 %v45, 14.285714
    %v62 = vmul.f32 %v46, 14.285714
    %v63 = vmul.f32 %v47, 14.285714
    %v64 = vmul.f32 %v48, 14.285714
    %v65 = vmul.f32 %v49, 14.285714
    %v66 = vmul.f32 %v50, 14.285714
    %v67 = vmul.f32 %v51, 14.285714
    %v68 = vmul.f32 %v52, 14.285714
    %v69 = vpack.c.bf16 %v53, %v53
    %v70 = vpack.c.bf16 %v54, %v54
    %v71 = vpack.c.bf16 %v55, %v55
    %v72 = vpack.c.bf16 %v56, %v56
    %v73 = vpack.c.bf16 %v57, %v57
    %v74 = vpack.c.bf16 %v58, %v58
    %v75 = vpack.c.bf16 %v59, %v59
    %v76 = vpack.c.bf16 %v60, %v60
    %v77 = vpack.c.bf16 %v61, %v61
    %v78 = vpack.c.bf16 %v62, %v62
    %v79 = vpack.c.bf16 %v63, %v63
    %v80 = vpack.c.bf16 %v64, %v64
    %v81 = vpack.c.bf16 %v65, %v65
    %v82 = vpack.c.bf16 %v66, %v66
    %v83 = vpack.c.bf16 %v67, %v67
    %v84 = vpack.c.bf16 %v68, %v68
    %85 = vst [vmem:[#allocation2] sm:$0xf] %v69
    %86 = vst [vmem:[#allocation2 + $0x4] sm:$0xf] %v70
    %87 = vst [vmem:[#allocation2 + $0x8] sm:$0xf] %v71
    %88 = vst [vmem:[#allocation2 + $0xc] sm:$0xf] %v72
    %89 = vst [vmem:[#allocation2 + $0x10] sm:$0xf] %v73
    %90 = vst [vmem:[#allocation2 + $0x14] sm:$0xf] %v74
    %91 = vst [vmem:[#allocation2 + $0x18] sm:$0xf] %v75
    %92 = vst [vmem:[#allocation2 + $0x1c] sm:$0xf] %v76
    %93 = vst [vmem:[#allocation2 + $0x20] sm:$0xf] %v77
    %94 = vst [vmem:[#allocation2 + $0x24] sm:$0xf] %v78
    %95 = vst [vmem:[#allocation2 + $0x28] sm:$0xf] %v79
    %96 = vst [vmem:[#allocation2 + $0x2c] sm:$0xf] %v80
    %97 = vst [vmem:[#allocation2 + $0x30] sm:$0xf] %v81
    %98 = vst [vmem:[#allocation2 + $0x34] sm:$0xf] %v82
    %99 = vst [vmem:[#allocation2 + $0x38] sm:$0xf] %v83
    %100 = vst [vmem:[#allocation2 + $0x3c] sm:$0xf] %v84
    %vm101 = vcmask 7168
    %102 = vst.msk [vmem:[#allocation3] sm:$0xff] %vm101, -1e+30
    %103 = vst.msk [vmem:[#allocation3 + $0x8] sm:$0xff] %vm101, -1e+30
    %104 = vst.msk [vmem:[#allocation3 + $0x10] sm:$0xff] %vm101, -1e+30
    %105 = vst.msk [vmem:[#allocation3 + $0x18] sm:$0xff] %vm101, -1e+30
    %106 = vst.msk [vmem:[#allocation3 + $0x20] sm:$0xff] %vm101, -1e+30
    %107 = vst.msk [vmem:[#allocation3 + $0x28] sm:$0xff] %vm101, -1e+30
    %108 = vst.msk [vmem:[#allocation3 + $0x30] sm:$0xff] %vm101, -1e+30
    %109 = vst.msk [vmem:[#allocation3 + $0x38] sm:$0xff] %vm101, -1e+30
    %110 = vst.msk [vmem:[#allocation3 + $0x40] sm:$0xff] %vm101, -1e+30
    %111 = vst.msk [vmem:[#allocation3 + $0x48] sm:$0xff] %vm101, -1e+30
    %112 = vst.msk [vmem:[#allocation3 + $0x50] sm:$0xff] %vm101, -1e+30
    %113 = vst.msk [vmem:[#allocation3 + $0x58] sm:$0xff] %vm101, -1e+30
    %114 = vst.msk [vmem:[#allocation3 + $0x60] sm:$0xff] %vm101, -1e+30
    %115 = vst.msk [vmem:[#allocation3 + $0x68] sm:$0xff] %vm101, -1e+30
    %116 = vst.msk [vmem:[#allocation3 + $0x70] sm:$0xff] %vm101, -1e+30
    %117 = vst.msk [vmem:[#allocation3 + $0x78] sm:$0xff] %vm101, -1e+30
    %118 = vst.msk [vmem:[#allocation4] sm:$0xff] %vm101, 0.0
    %119 = vst.msk [vmem:[#allocation4 + $0x8] sm:$0xff] %vm101, 0.0
    %120 = vst.msk [vmem:[#allocation4 + $0x10] sm:$0xff] %vm101, 0.0
    %121 = vst.msk [vmem:[#allocation4 + $0x18] sm:$0xff] %vm101, 0.0
    %122 = vst.msk [vmem:[#allocation4 + $0x20] sm:$0xff] %vm101, 0.0
    %123 = vst.msk [vmem:[#allocation4 + $0x28] sm:$0xff] %vm101, 0.0
    %124 = vst.msk [vmem:[#allocation4 + $0x30] sm:$0xff] %vm101, 0.0
    %125 = vst.msk [vmem:[#allocation4 + $0x38] sm:$0xff] %vm101, 0.0
    %126 = vst.msk [vmem:[#allocation4 + $0x40] sm:$0xff] %vm101, 0.0
    %127 = vst.msk [vmem:[#allocation4 + $0x48] sm:$0xff] %vm101, 0.0
    %128 = vst.msk [vmem:[#allocation4 + $0x50] sm:$0xff] %vm101, 0.0
    %129 = vst.msk [vmem:[#allocation4 + $0x58] sm:$0xff] %vm101, 0.0
    %130 = vst.msk [vmem:[#allocation4 + $0x60] sm:$0xff] %vm101, 0.0
    %131 = vst.msk [vmem:[#allocation4 + $0x68] sm:$0xff] %vm101, 0.0
    %132 = vst.msk [vmem:[#allocation4 + $0x70] sm:$0xff] %vm101, 0.0
    %133 = vst.msk [vmem:[#allocation4 + $0x78] sm:$0xff] %vm101, 0.0
    %134 = vst.msk [vmem:[#allocation5] sm:$0xff] %vm101, 0.0
    %135 = vst.msk [vmem:[#allocation5 + $0x8] sm:$0xff] %vm101, 0.0
    %136 = vst.msk [vmem:[#allocation5 + $0x10] sm:$0xff] %vm101, 0.0
    %137 = vst.msk [vmem:[#allocation5 + $0x18] sm:$0xff] %vm101, 0.0
    %138 = vst.msk [vmem:[#allocation5 + $0x20] sm:$0xff] %vm101, 0.0
    %139 = vst.msk [vmem:[#allocation5 + $0x28] sm:$0xff] %vm101, 0.0
    %140 = vst.msk [vmem:[#allocation5 + $0x30] sm:$0xff] %vm101, 0.0
    %141 = vst.msk [vmem:[#allocation5 + $0x38] sm:$0xff] %vm101, 0.0
    %142 = vst.msk [vmem:[#allocation5 + $0x40] sm:$0xff] %vm101, 0.0
    %143 = vst.msk [vmem:[#allocation5 + $0x48] sm:$0xff] %vm101, 0.0
    %144 = vst.msk [vmem:[#allocation5 + $0x50] sm:$0xff] %vm101, 0.0
    %145 = vst.msk [vmem:[#allocation5 + $0x58] sm:$0xff] %vm101, 0.0
    %146 = vst.msk [vmem:[#allocation5 + $0x60] sm:$0xff] %vm101, 0.0
    %147 = vst.msk [vmem:[#allocation5 + $0x68] sm:$0xff] %vm101, 0.0
    %148 = vst.msk [vmem:[#allocation5 + $0x70] sm:$0xff] %vm101, 0.0
    %149 = vst.msk [vmem:[#allocation5 + $0x78] sm:$0xff] %vm101, 0.0
    %150 = vst.msk [vmem:[#allocation6] sm:$0xff] %vm101, 0.0
    %151 = vst.msk [vmem:[#allocation6 + $0x8] sm:$0xff] %vm101, 0.0
    %152 = vst.msk [vmem:[#allocation6 + $0x10] sm:$0xff] %vm101, 0.0
    %153 = vst.msk [vmem:[#allocation6 + $0x18] sm:$0xff] %vm101, 0.0
    %154 = vst.msk [vmem:[#allocation6 + $0x20] sm:$0xff] %vm101, 0.0
    %155 = vst.msk [vmem:[#allocation6 + $0x28] sm:$0xff] %vm101, 0.0
    %156 = vst.msk [vmem:[#allocation6 + $0x30] sm:$0xff] %vm101, 0.0
    %157 = vst.msk [vmem:[#allocation6 + $0x38] sm:$0xff] %vm101, 0.0
    %158 = vst.msk [vmem:[#allocation6 + $0x40] sm:$0xff] %vm101, 0.0
    %159 = vst.msk [vmem:[#allocation6 + $0x48] sm:$0xff] %vm101, 0.0
    %160 = vst.msk [vmem:[#allocation6 + $0x50] sm:$0xff] %vm101, 0.0
    %161 = vst.msk [vmem:[#allocation6 + $0x58] sm:$0xff] %vm101, 0.0
    %162 = vst.msk [vmem:[#allocation6 + $0x60] sm:$0xff] %vm101, 0.0
    %163 = vst.msk [vmem:[#allocation6 + $0x68] sm:$0xff] %vm101, 0.0
    %164 = vst.msk [vmem:[#allocation6 + $0x70] sm:$0xff] %vm101, 0.0
    %165 = vst.msk [vmem:[#allocation6 + $0x78] sm:$0xff] %vm101, 0.0
  $region21: #{tpu_custom_call.1} parent=0 // pred_fallthru
    _
  %v166 = vld [vmem:[#allocation2] sm:$0xf]
  %v167 = vld [vmem:[#allocation2 + $0x4] sm:$0xf]
  %v168 = vld [vmem:[#allocation2 + $0x8] sm:$0xf]
  %v169 = vld [vmem:[#allocation2 + $0xc] sm:$0xf]
  %v170 = vld [vmem:[#allocation2 + $0x10] sm:$0xf]
  %v171 = vld [vmem:[#allocation2 + $0x14] sm:$0xf]
  %v172 = vld [vmem:[#allocation2 + $0x18] sm:$0xf]
  %v173 = vld [vmem:[#allocation2 + $0x1c] sm:$0xf]
  %v174 = vld [vmem:[#allocation2 + $0x20] sm:$0xf]
  %v175 = vld [vmem:[#allocation2 + $0x24] sm:$0xf]
  %v176 = vld [vmem:[#allocation2 + $0x28] sm:$0xf]
  %v177 = vld [vmem:[#allocation2 + $0x2c] sm:$0xf]
  %v178 = vld [vmem:[#allocation2 + $0x30] sm:$0xf]
  %v179 = vld [vmem:[#allocation2 + $0x34] sm:$0xf]
  %v180 = vld [vmem:[#allocation2 + $0x38] sm:$0xf]
  %v181 = vld [vmem:[#allocation2 + $0x3c] sm:$0xf]
  %v182 = vld [vmem:[%s1] sm:$0xf]
  %v183 = vld [vmem:[%s1 + $0x4] sm:$0xf]
  %v184 = vld [vmem:[%s1 + $0x8] sm:$0xf]
  %v185 = vld [vmem:[%s1 + $0xc] sm:$0xf]
  %v186 = vld [vmem:[%s1 + $0x10] sm:$0xf]
  %v187 = vld [vmem:[%s1 + $0x14] sm:$0xf]
  %v188 = vld [vmem:[%s1 + $0x18] sm:$0xf]
  %v189 = vld [vmem:[%s1 + $0x1c] sm:$0xf]
  %v190 = vld [vmem:[%s1 + $0x20] sm:$0xf]
  %v191 = vld [vmem:[%s1 + $0x24] sm:$0xf]
  %v192 = vld [vmem:[%s1 + $0x28] sm:$0xf]
  %v193 = vld [vmem:[%s1 + $0x2c] sm:$0xf]
  %v194 = vld [vmem:[%s1 + $0x30] sm:$0xf]
  %v195 = vld [vmem:[%s1 + $0x34] sm:$0xf]
  %v196 = vld [vmem:[%s1 + $0x38] sm:$0xf]
  %v197 = vld [vmem:[%s1 + $0x3c] sm:$0xf]
  %v214 = vunpack.c.l.b16 %v166
  %v215 = vunpack.c.l.b16 %v167
  %v216 = vunpack.c.l.b16 %v168
  %v217 = vunpack.c.l.b16 %v169
  %v218 = vunpack.c.l.b16 %v170
  %v219 = vunpack.c.l.b16 %v171
  %v220 = vunpack.c.l.b16 %v172
  %v221 = vunpack.c.l.b16 %v173
  %v222 = vunpack.c.l.b16 %v174
  %v223 = vunpack.c.l.b16 %v175
  %v224 = vunpack.c.l.b16 %v176
  %v225 = vunpack.c.l.b16 %v177
  %v226 = vunpack.c.l.b16 %v178
  %v227 = vunpack.c.l.b16 %v179
  %v228 = vunpack.c.l.b16 %v180
  %v229 = vunpack.c.l.b16 %v181
  %v230 = vpack.c.b16 %v215, %v214
  %v231 = vpack.c.b16 %v217, %v216
  %v232 = vpack.c.b16 %v219, %v218
  %v233 = vpack.c.b16 %v221, %v220
  %v234 = vpack.c.b16 %v223, %v222
  %v235 = vpack.c.b16 %v225, %v224
  %v236 = vpack.c.b16 %v227, %v226
  %v237 = vpack.c.b16 %v229, %v228
  %v262 = vunpack.c.l.b16 %v182
  %v263 = vunpack.c.l.b16 %v183
  %v264 = vunpack.c.l.b16 %v184
  %v265 = vunpack.c.l.b16 %v185
  %v266 = vunpack.c.l.b16 %v186
  %v267 = vunpack.c.l.b16 %v187
  %v268 = vunpack.c.l.b16 %v188
  %v269 = vunpack.c.l.b16 %v189
  %v270 = vunpack.c.l.b16 %v190
  %v271 = vunpack.c.l.b16 %v191
  %v272 = vunpack.c.l.b16 %v192
  %v273 = vunpack.c.l.b16 %v193
  %v274 = vunpack.c.l.b16 %v194
  %v275 = vunpack.c.l.b16 %v195
  %v276 = vunpack.c.l.b16 %v196
  %v277 = vunpack.c.l.b16 %v197
  %v278 = vpack.c.b16 %v263, %v262
  %v279 = vpack.c.b16 %v265, %v264
  %v280 = vpack.c.b16 %v267, %v266
  %v281 = vpack.c.b16 %v269, %v268
  %v282 = vpack.c.b16 %v271, %v270
  %v283 = vpack.c.b16 %v273, %v272
  %v284 = vpack.c.b16 %v275, %v274
  %v285 = vpack.c.b16 %v277, %v276
  %294 = vmatpush.bf16.xpose.msra.mxu0 %v285
  %295 = vmatpush.bf16.xpose.msra.mxu0 %v284
  %296 = vmatpush.bf16.xpose.msra.mxu0 %v283
  %297 = vmatpush.bf16.xpose.msra.mxu0 %v282
  %298 = vmatpush.bf16.xpose.msra.mxu0 %v281
  %299 = vmatpush.bf16.xpose.msra.mxu0 %v280
  %300 = vmatpush.bf16.xpose.msra.mxu0 %v279
  %301 = vmatpush.bf16.xpose.msra.mxu0 %v278
  %302 = vmatmul.bf16.gmra.mxu0 %v230
  %v303 = vpop.f32.mrf.mxu0
  %v304 = vadd.f32 0.0, %v303
  %v305 = vpop.f32.mrf.mxu0
  %v306 = vadd.f32 0.0, %v305
  %307 = vmatmul.bf16.gmra.mxu0 %v231
  %v308 = vpop.f32.mrf.mxu0
  %v309 = vadd.f32 0.0, %v308
  %v310 = vpop.f32.mrf.mxu0
  %v311 = vadd.f32 0.0, %v310
  %312 = vmatmul.bf16.gmra.mxu0 %v232
  %v313 = vpop.f32.mrf.mxu0
  %v314 = vadd.f32 0.0, %v313
  %v315 = vpop.f32.mrf.mxu0
  %v316 = vadd.f32 0.0, %v315
  %317 = vmatmul.bf16.gmra.mxu0 %v233
  %v318 = vpop.f32.mrf.mxu0
  %v319 = vadd.f32 0.0, %v318
  %v320 = vpop.f32.mrf.mxu0
  %v321 = vadd.f32 0.0, %v320
  %322 = vmatmul.bf16.gmra.mxu0 %v234
  %v323 = vpop.f32.mrf.mxu0
  %v324 = vadd.f32 0.0, %v323
  %v325 = vpop.f32.mrf.mxu0
  %v326 = vadd.f32 0.0, %v325
  %327 = vmatmul.bf16.gmra.mxu0 %v235
  %v328 = vpop.f32.mrf.mxu0
  %v329 = vadd.f32 0.0, %v328
  %v330 = vpop.f32.mrf.mxu0
  %v331 = vadd.f32 0.0, %v330
  %332 = vmatmul.bf16.gmra.mxu0 %v236
  %v333 = vpop.f32.mrf.mxu0
  %v334 = vadd.f32 0.0, %v333
  %v335 = vpop.f32.mrf.mxu0
  %v336 = vadd.f32 0.0, %v335
  %337 = vmatmul.bf16.gmra.mxu0 %v237
  %v338 = vpop.f32.mrf.mxu0
  %v339 = vadd.f32 0.0, %v338
  %v340 = vpop.f32.mrf.mxu0
  %v341 = vadd.f32 0.0, %v340
  %342 = vdwg.mxu0
  %s343 = smul.u32 0, 128
  %v344 = vlaneseq
  %v345 = vshrl.u32 %v344, 7
  %v346 = vadd.s32 %v345, 8
  %v347 = vadd.s32 %v345, 16
  %v348 = vadd.s32 %v345, 24
  %v349 = vadd.s32 %v345, 32
  %v350 = vadd.s32 %v345, 40
  %v351 = vadd.s32 %v345, 48
  %v352 = vadd.s32 %v345, 56
  %v353 = vadd.s32 %v345, 64
  %v354 = vadd.s32 %v345, 72
  %v355 = vadd.s32 %v345, 80
  %v356 = vadd.s32 %v345, 88
  %v357 = vadd.s32 %v345, 96
  %v358 = vadd.s32 %v345, 104
  %v359 = vadd.s32 %v345, 112
  %v360 = vadd.s32 %v345, 120
  %v361 = vstv %s343
  %v362 = vadd.s32 %v361, %v345
  %v363 = vadd.s32 %v361, %v346
  %v364 = vadd.s32 %v361, %v347
  %v365 = vadd.s32 %v361, %v348
  %v366 = vadd.s32 %v361, %v349
  %v367 = vadd.s32 %v361, %v350
  %v368 = vadd.s32 %v361, %v351
  %v369 = vadd.s32 %v361, %v352
  %v370 = vadd.s32 %v361, %v353
  %v371 = vadd.s32 %v361, %v354
  %v372 = vadd.s32 %v361, %v355
  %v373 = vadd.s32 %v361, %v356
  %v374 = vadd.s32 %v361, %v357
  %v375 = vadd.s32 %v361, %v358
  %v376 = vadd.s32 %v361, %v359
  %v377 = vadd.s32 %v361, %v360
  %s378 = smul.u32 0, 128
  %v379 = vlaneseq
  %v380 = vand.u32 %v379, 127
  %v381 = vstv %s378
  %v382 = vadd.s32 %v381, %v380
  %vm383 = vcmp.lt.s32.totalorder %v382, 8
  %vm384 = vcmp.ne.s32.totalorder %v362, %v382
  %vm385 = vcmp.ne.s32.totalorder %v363, %v382
  %vm386 = vcmp.ne.s32.totalorder %v364, %v382
  %vm387 = vcmp.ne.s32.totalorder %v365, %v382
  %vm388 = vcmp.ne.s32.totalorder %v366, %v382
  %vm389 = vcmp.ne.s32.totalorder %v367, %v382
  %vm390 = vcmp.ne.s32.totalorder %v368, %v382
  %vm391 = vcmp.ne.s32.totalorder %v369, %v382
  %vm392 = vcmp.ne.s32.totalorder %v370, %v382
  %vm393 = vcmp.ne.s32.totalorder %v371, %v382
  %vm394 = vcmp.ne.s32.totalorder %v372, %v382
  %vm395 = vcmp.ne.s32.totalorder %v373, %v382
  %vm396 = vcmp.ne.s32.totalorder %v374, %v382
  %vm397 = vcmp.ne.s32.totalorder %v375, %v382
  %vm398 = vcmp.ne.s32.totalorder %v376, %v382
  %vm399 = vcmp.ne.s32.totalorder %v377, %v382
  %vm400 = vmand %vm383, %vm384
  %vm401 = vmand %vm383, %vm385
  %vm402 = vmand %vm383, %vm386
  %vm403 = vmand %vm383, %vm387
  %vm404 = vmand %vm383, %vm388
  %vm405 = vmand %vm383, %vm389
  %vm406 = vmand %vm383, %vm390
  %vm407 = vmand %vm383, %vm391
  %vm408 = vmand %vm383, %vm392
  %vm409 = vmand %vm383, %vm393
  %vm410 = vmand %vm383, %vm394
  %vm411 = vmand %vm383, %vm395
  %vm412 = vmand %vm383, %vm396
  %vm413 = vmand %vm383, %vm397
  %vm414 = vmand %vm383, %vm398
  %vm415 = vmand %vm383, %vm399
  %v416 = vld [vmem:[#allocation3] sm:$0xff]
  %v417 = vld [vmem:[#allocation3 + $0x8] sm:$0xff]
  %v418 = vld [vmem:[#allocation3 + $0x10] sm:$0xff]
  %v419 = vld [vmem:[#allocation3 + $0x18] sm:$0xff]
  %v420 = vld [vmem:[#allocation3 + $0x20] sm:$0xff]
  %v421 = vld [vmem:[#allocation3 + $0x28] sm:$0xff]
  %v422 = vld [vmem:[#allocation3 + $0x30] sm:$0xff]
  %v423 = vld [vmem:[#allocation3 + $0x38] sm:$0xff]
  %v424 = vld [vmem:[#allocation3 + $0x40] sm:$0xff]
  %v425 = vld [vmem:[#allocation3 + $0x48] sm:$0xff]
  %v426 = vld [vmem:[#allocation3 + $0x50] sm:$0xff]
  %v427 = vld [vmem:[#allocation3 + $0x58] sm:$0xff]
  %v428 = vld [vmem:[#allocation3 + $0x60] sm:$0xff]
  %v429 = vld [vmem:[#allocation3 + $0x68] sm:$0xff]
  %v430 = vld [vmem:[#allocation3 + $0x70] sm:$0xff]
  %v431 = vld [vmem:[#allocation3 + $0x78] sm:$0xff]
  %v432 = vsel %vm383, %v304, -1e+30
  %v433 = vsel %vm383, %v306, -1e+30
  %v434 = vsel %vm383, %v309, -1e+30
  %v435 = vsel %vm383, %v311, -1e+30
  %v436 = vsel %vm383, %v314, -1e+30
  %v437 = vsel %vm383, %v316, -1e+30
  %v438 = vsel %vm383, %v319, -1e+30
  %v439 = vsel %vm383, %v321, -1e+30
  %v440 = vsel %vm383, %v324, -1e+30
  %v441 = vsel %vm383, %v326, -1e+30
  %v442 = vsel %vm383, %v329, -1e+30
  %v443 = vsel %vm383, %v331, -1e+30
  %v444 = vsel %vm383, %v334, -1e+30
  %v445 = vsel %vm383, %v336, -1e+30
  %v446 = vsel %vm383, %v339, -1e+30
  %v447 = vsel %vm383, %v341, -1e+30
  %448 = vmax.xlane.f32.xlu0 %v432
  %v449 = vpop.xlane.xlu0 %448
  %450 = vmax.xlane.f32.xlu0 %v433
  %v451 = vpop.xlane.xlu0 %450
  %452 = vmax.xlane.f32.xlu0 %v434
  %v453 = vpop.xlane.xlu0 %452
  %454 = vmax.xlane.f32.xlu0 %v435
  %v455 = vpop.xlane.xlu0 %454
  %456 = vmax.xlane.f32.xlu0 %v436
  %v457 = vpop.xlane.xlu0 %456
  %458 = vmax.xlane.f32.xlu0 %v437
  %v459 = vpop.xlane.xlu0 %458
  %460 = vmax.xlane.f32.xlu0 %v438
  %v461 = vpop.xlane.xlu0 %460
  %462 = vmax.xlane.f32.xlu0 %v439
  %v463 = vpop.xlane.xlu0 %462
  %464 = vmax.xlane.f32.xlu0 %v440
  %v465 = vpop.xlane.xlu0 %464
  %466 = vmax.xlane.f32.xlu0 %v441
  %v467 = vpop.xlane.xlu0 %466
  %468 = vmax.xlane.f32.xlu0 %v442
  %v469 = vpop.xlane.xlu0 %468
  %470 = vmax.xlane.f32.xlu0 %v443
  %v471 = vpop.xlane.xlu0 %470
  %472 = vmax.xlane.f32.xlu0 %v444
  %v473 = vpop.xlane.xlu0 %472
  %474 = vmax.xlane.f32.xlu0 %v445
  %v475 = vpop.xlane.xlu0 %474
  %476 = vmax.xlane.f32.xlu0 %v446
  %v477 = vpop.xlane.xlu0 %476
  %478 = vmax.xlane.f32.xlu0 %v447
  %v479 = vpop.xlane.xlu0 %478
  %v480 = vmax.f32 %v416, %v449
  %v481 = vmax.f32 %v417, %v451
  %v482 = vmax.f32 %v418, %v453
  %v483 = vmax.f32 %v419, %v455
  %v484 = vmax.f32 %v420, %v457
  %v485 = vmax.f32 %v421, %v459
  %v486 = vmax.f32 %v422, %v461
  %v487 = vmax.f32 %v423, %v463
  %v488 = vmax.f32 %v424, %v465
  %v489 = vmax.f32 %v425, %v467
  %v490 = vmax.f32 %v426, %v469
  %v491 = vmax.f32 %v427, %v471
  %v492 = vmax.f32 %v428, %v473
  %v493 = vmax.f32 %v429, %v475
  %v494 = vmax.f32 %v430, %v477
  %v495 = vmax.f32 %v431, %v479
  %v496 = vsub.f32 %v416, %v480
  %v497 = vsub.f32 %v417, %v481
  %v498 = vsub.f32 %v418, %v482
  %v499 = vsub.f32 %v419, %v483
  %v500 = vsub.f32 %v420, %v484
  %v501 = vsub.f32 %v421, %v485
  %v502 = vsub.f32 %v422, %v486
  %v503 = vsub.f32 %v423, %v487
  %v504 = vsub.f32 %v424, %v488
  %v505 = vsub.f32 %v425, %v489
  %v506 = vsub.f32 %v426, %v490
  %v507 = vsub.f32 %v427, %v491
  %v508 = vsub.f32 %v428, %v492
  %v509 = vsub.f32 %v429, %v493
  %v510 = vsub.f32 %v430, %v494
  %v511 = vsub.f32 %v431, %v495
  %v512 = vmul.f32 %v496, 1.442695
  %v513 = vpow.pop %v512
  %v514 = vmul.f32 %v497, 1.442695
  %v515 = vpow.pop %v514
  %v516 = vmul.f32 %v498, 1.442695
  %v517 = vpow.pop %v516
  %v518 = vmul.f32 %v499, 1.442695
  %v519 = vpow.pop %v518
  %v520 = vmul.f32 %v500, 1.442695
  %v521 = vpow.pop %v520
  %v522 = vmul.f32 %v501, 1.442695
  %v523 = vpow.pop %v522
  %v524 = vmul.f32 %v502, 1.442695
  %v525 = vpow.pop %v524
  %v526 = vmul.f32 %v503, 1.442695
  %v527 = vpow.pop %v526
  %v528 = vmul.f32 %v504, 1.442695
  %v529 = vpow.pop %v528
  %v530 = vmul.f32 %v505, 1.442695
  %v531 = vpow.pop %v530
  %v532 = vmul.f32 %v506, 1.442695
  %v533 = vpow.pop %v532
  %v534 = vmul.f32 %v507, 1.442695
  %v535 = vpow.pop %v534
  %v536 = vmul.f32 %v508, 1.442695
  %v537 = vpow.pop %v536
  %v538 = vmul.f32 %v509, 1.442695
  %v539 = vpow.pop %v538
  %v540 = vmul.f32 %v510, 1.442695
  %v541 = vpow.pop %v540
  %v542 = vmul.f32 %v511, 1.442695
  %v543 = vpow.pop %v542
  %545 = vset.pattern.permute.xlu0 0
  %546 = vperm.xlu0 %545, %v480
  %v547 = vpop.permute.xlu0 %546
  %550 = vset.pattern.permute.xlu0 0
  %551 = vperm.xlu0 %550, %v481
  %v552 = vpop.permute.xlu0 %551
  %555 = vset.pattern.permute.xlu0 0
  %556 = vperm.xlu0 %555, %v482
  %v557 = vpop.permute.xlu0 %556
  %560 = vset.pattern.permute.xlu0 0
  %561 = vperm.xlu0 %560, %v483
  %v562 = vpop.permute.xlu0 %561
  %565 = vset.pattern.permute.xlu0 0
  %566 = vperm.xlu0 %565, %v484
  %v567 = vpop.permute.xlu0 %566
  %570 = vset.pattern.permute.xlu0 0
  %571 = vperm.xlu0 %570, %v485
  %v572 = vpop.permute.xlu0 %571
  %575 = vset.pattern.permute.xlu0 0
  %576 = vperm.xlu0 %575, %v486
  %v577 = vpop.permute.xlu0 %576
  %580 = vset.pattern.permute.xlu0 0
  %581 = vperm.xlu0 %580, %v487
  %v582 = vpop.permute.xlu0 %581
  %585 = vset.pattern.permute.xlu0 0
  %586 = vperm.xlu0 %585, %v488
  %v587 = vpop.permute.xlu0 %586
  %590 = vset.pattern.permute.xlu0 0
  %591 = vperm.xlu0 %590, %v489
  %v592 = vpop.permute.xlu0 %591
  %595 = vset.pattern.permute.xlu0 0
  %596 = vperm.xlu0 %595, %v490
  %v597 = vpop.permute.xlu0 %596
  %600 = vset.pattern.permute.xlu0 0
  %601 = vperm.xlu0 %600, %v491
  %v602 = vpop.permute.xlu0 %601
  %605 = vset.pattern.permute.xlu0 0
  %606 = vperm.xlu0 %605, %v492
  %v607 = vpop.permute.xlu0 %606
  %610 = vset.pattern.permute.xlu0 0
  %611 = vperm.xlu0 %610, %v493
  %v612 = vpop.permute.xlu0 %611
  %615 = vset.pattern.permute.xlu0 0
  %616 = vperm.xlu0 %615, %v494
  %v617 = vpop.permute.xlu0 %616
  %620 = vset.pattern.permute.xlu0 0
  %621 = vperm.xlu0 %620, %v495
  %v622 = vpop.permute.xlu0 %621
  %v624 = vsub.f32 %v304, %v547
  %v625 = vsub.f32 %v306, %v552
  %v626 = vsub.f32 %v309, %v557
  %v627 = vsub.f32 %v311, %v562
  %v628 = vsub.f32 %v314, %v567
  %v629 = vsub.f32 %v316, %v572
  %v630 = vsub.f32 %v319, %v577
  %v631 = vsub.f32 %v321, %v582
  %v632 = vsub.f32 %v324, %v587
  %v633 = vsub.f32 %v326, %v592
  %v634 = vsub.f32 %v329, %v597
  %v635 = vsub.f32 %v331, %v602
  %v636 = vsub.f32 %v334, %v607
  %v637 = vsub.f32 %v336, %v612
  %v638 = vsub.f32 %v339, %v617
  %v639 = vsub.f32 %v341, %v622
  %v640 = vmul.f32 %v624, 1.442695
  %v641 = vpow.pop %v640
  %v642 = vmul.f32 %v625, 1.442695
  %v643 = vpow.pop %v642
  %v644 = vmul.f32 %v626, 1.442695
  %v645 = vpow.pop %v644
  %v646 = vmul.f32 %v627, 1.442695
  %v647 = vpow.pop %v646
  %v648 = vmul.f32 %v628, 1.442695
  %v649 = vpow.pop %v648
  %v650 = vmul.f32 %v629, 1.442695
  %v651 = vpow.pop %v650
  %v652 = vmul.f32 %v630, 1.442695
  %v653 = vpow.pop %v652
  %v654 = vmul.f32 %v631, 1.442695
  %v655 = vpow.pop %v654
  %v656 = vmul.f32 %v632, 1.442695
  %v657 = vpow.pop %v656
  %v658 = vmul.f32 %v633, 1.442695
  %v659 = vpow.pop %v658
  %v660 = vmul.f32 %v634, 1.442695
  %v661 = vpow.pop %v660
  %v662 = vmul.f32 %v635, 1.442695
  %v663 = vpow.pop %v662
  %v664 = vmul.f32 %v636, 1.442695
  %v665 = vpow.pop %v664
  %v666 = vmul.f32 %v637, 1.442695
  %v667 = vpow.pop %v666
  %v668 = vmul.f32 %v638, 1.442695
  %v669 = vpow.pop %v668
  %v670 = vmul.f32 %v639, 1.442695
  %v671 = vpow.pop %v670
  %v672 = vsel %vm400, %v641, 0.0
  %v673 = vsel %vm401, %v643, 0.0
  %v674 = vsel %vm402, %v645, 0.0
  %v675 = vsel %vm403, %v647, 0.0
  %v676 = vsel %vm404, %v649, 0.0
  %v677 = vsel %vm405, %v651, 0.0
  %v678 = vsel %vm406, %v653, 0.0
  %v679 = vsel %vm407, %v655, 0.0
  %v680 = vsel %vm408, %v657, 0.0
  %v681 = vsel %vm409, %v659, 0.0
  %v682 = vsel %vm410, %v661, 0.0
  %v683 = vsel %vm411, %v663, 0.0
  %v684 = vsel %vm412, %v665, 0.0
  %v685 = vsel %vm413, %v667, 0.0
  %v686 = vsel %vm414, %v669, 0.0
  %v687 = vsel %vm415, %v671, 0.0
  %v688 = vld [vmem:[#allocation4] sm:$0xff]
  %v689 = vld [vmem:[#allocation4 + $0x8] sm:$0xff]
  %v690 = vld [vmem:[#allocation4 + $0x10] sm:$0xff]
  %v691 = vld [vmem:[#allocation4 + $0x18] sm:$0xff]
  %v692 = vld [vmem:[#allocation4 + $0x20] sm:$0xff]
  %v693 = vld [vmem:[#allocation4 + $0x28] sm:$0xff]
  %v694 = vld [vmem:[#allocation4 + $0x30] sm:$0xff]
  %v695 = vld [vmem:[#allocation4 + $0x38] sm:$0xff]
  %v696 = vld [vmem:[#allocation4 + $0x40] sm:$0xff]
  %v697 = vld [vmem:[#allocation4 + $0x48] sm:$0xff]
  %v698 = vld [vmem:[#allocation4 + $0x50] sm:$0xff]
  %v699 = vld [vmem:[#allocation4 + $0x58] sm:$0xff]
  %v700 = vld [vmem:[#allocation4 + $0x60] sm:$0xff]
  %v701 = vld [vmem:[#allocation4 + $0x68] sm:$0xff]
  %v702 = vld [vmem:[#allocation4 + $0x70] sm:$0xff]
  %v703 = vld [vmem:[#allocation4 + $0x78] sm:$0xff]
  %v704 = vmul.f32 %v513, %v688
  %v705 = vmul.f32 %v515, %v689
  %v706 = vmul.f32 %v517, %v690
  %v707 = vmul.f32 %v519, %v691
  %v708 = vmul.f32 %v521, %v692
  %v709 = vmul.f32 %v523, %v693
  %v710 = vmul.f32 %v525, %v694
  %v711 = vmul.f32 %v527, %v695
  %v712 = vmul.f32 %v529, %v696
  %v713 = vmul.f32 %v531, %v697
  %v714 = vmul.f32 %v533, %v698
  %v715 = vmul.f32 %v535, %v699
  %v716 = vmul.f32 %v537, %v700
  %v717 = vmul.f32 %v539, %v701
  %v718 = vmul.f32 %v541, %v702
  %v719 = vmul.f32 %v543, %v703
  %720 = vadd.xlane.f32.xlu0 %v672
  %v721 = vpop.xlane.xlu0 %720
  %722 = vadd.xlane.f32.xlu0 %v673
  %v723 = vpop.xlane.xlu0 %722
  %724 = vadd.xlane.f32.xlu0 %v674
  %v725 = vpop.xlane.xlu0 %724
  %726 = vadd.xlane.f32.xlu0 %v675
  %v727 = vpop.xlane.xlu0 %726
  %728 = vadd.xlane.f32.xlu0 %v676
  %v729 = vpop.xlane.xlu0 %728
  %730 = vadd.xlane.f32.xlu0 %v677
  %v731 = vpop.xlane.xlu0 %730
  %732 = vadd.xlane.f32.xlu0 %v678
  %v733 = vpop.xlane.xlu0 %732
  %734 = vadd.xlane.f32.xlu0 %v679
  %v735 = vpop.xlane.xlu0 %734
  %736 = vadd.xlane.f32.xlu0 %v680
  %v737 = vpop.xlane.xlu0 %736
  %738 = vadd.xlane.f32.xlu0 %v681
  %v739 = vpop.xlane.xlu0 %738
  %740 = vadd.xlane.f32.xlu0 %v682
  %v741 = vpop.xlane.xlu0 %740
  %742 = vadd.xlane.f32.xlu0 %v683
  %v743 = vpop.xlane.xlu0 %742
  %744 = vadd.xlane.f32.xlu0 %v684
  %v745 = vpop.xlane.xlu0 %744
  %746 = vadd.xlane.f32.xlu0 %v685
  %v747 = vpop.xlane.xlu0 %746
  %748 = vadd.xlane.f32.xlu0 %v686
  %v749 = vpop.xlane.xlu0 %748
  %750 = vadd.xlane.f32.xlu0 %v687
  %v751 = vpop.xlane.xlu0 %750
  %v752 = vadd.f32 %v704, %v721
  %v753 = vadd.f32 %v705, %v723
  %v754 = vadd.f32 %v706, %v725
  %v755 = vadd.f32 %v707, %v727
  %v756 = vadd.f32 %v708, %v729
  %v757 = vadd.f32 %v709, %v731
  %v758 = vadd.f32 %v710, %v733
  %v759 = vadd.f32 %v711, %v735
  %v760 = vadd.f32 %v712, %v737
  %v761 = vadd.f32 %v713, %v739
  %v762 = vadd.f32 %v714, %v741
  %v763 = vadd.f32 %v715, %v743
  %v764 = vadd.f32 %v716, %v745
  %v765 = vadd.f32 %v717, %v747
  %v766 = vadd.f32 %v718, %v749
  %v767 = vadd.f32 %v719, %v751
  %vm768 = vcmask 7168
  %769 = vst.msk [vmem:[#allocation4] sm:$0xff] %vm768, %v752
  %770 = vst.msk [vmem:[#allocation4 + $0x8] sm:$0xff] %vm768, %v753
  %771 = vst.msk [vmem:[#allocation4 + $0x10] sm:$0xff] %vm768, %v754
  %772 = vst.msk [vmem:[#allocation4 + $0x18] sm:$0xff] %vm768, %v755
  %773 = vst.msk [vmem:[#allocation4 + $0x20] sm:$0xff] %vm768, %v756
  %774 = vst.msk [vmem:[#allocation4 + $0x28] sm:$0xff] %vm768, %v757
  %775 = vst.msk [vmem:[#allocation4 + $0x30] sm:$0xff] %vm768, %v758
  %776 = vst.msk [vmem:[#allocation4 + $0x38] sm:$0xff] %vm768, %v759
  %777 = vst.msk [vmem:[#allocation4 + $0x40] sm:$0xff] %vm768, %v760
  %778 = vst.msk [vmem:[#allocation4 + $0x48] sm:$0xff] %vm768, %v761
  %779 = vst.msk [vmem:[#allocation4 + $0x50] sm:$0xff] %vm768, %v762
  %780 = vst.msk [vmem:[#allocation4 + $0x58] sm:$0xff] %vm768, %v763
  %781 = vst.msk [vmem:[#allocation4 + $0x60] sm:$0xff] %vm768, %v764
  %782 = vst.msk [vmem:[#allocation4 + $0x68] sm:$0xff] %vm768, %v765
  %783 = vst.msk [vmem:[#allocation4 + $0x70] sm:$0xff] %vm768, %v766
  %784 = vst.msk [vmem:[#allocation4 + $0x78] sm:$0xff] %vm768, %v767
  %785 = vst.msk [vmem:[#allocation3] sm:$0xff] %vm768, %v480
  %786 = vst.msk [vmem:[#allocation3 + $0x8] sm:$0xff] %vm768, %v481
  %787 = vst.msk [vmem:[#allocation3 + $0x10] sm:$0xff] %vm768, %v482
  %788 = vst.msk [vmem:[#allocation3 + $0x18] sm:$0xff] %vm768, %v483
  %789 = vst.msk [vmem:[#allocation3 + $0x20] sm:$0xff] %vm768, %v484
  %790 = vst.msk [vmem:[#allocation3 + $0x28] sm:$0xff] %vm768, %v485
  %791 = vst.msk [vmem:[#allocation3 + $0x30] sm:$0xff] %vm768, %v486
  %792 = vst.msk [vmem:[#allocation3 + $0x38] sm:$0xff] %vm768, %v487
  %793 = vst.msk [vmem:[#allocation3 + $0x40] sm:$0xff] %vm768, %v488
  %794 = vst.msk [vmem:[#allocation3 + $0x48] sm:$0xff] %vm768, %v489
  %795 = vst.msk [vmem:[#allocation3 + $0x50] sm:$0xff] %vm768, %v490
  %796 = vst.msk [vmem:[#allocation3 + $0x58] sm:$0xff] %vm768, %v491
  %797 = vst.msk [vmem:[#allocation3 + $0x60] sm:$0xff] %vm768, %v492
  %798 = vst.msk [vmem:[#allocation3 + $0x68] sm:$0xff] %vm768, %v493
  %799 = vst.msk [vmem:[#allocation3 + $0x70] sm:$0xff] %vm768, %v494
  %800 = vst.msk [vmem:[#allocation3 + $0x78] sm:$0xff] %vm768, %v495
  %v801 = vld [vmem:[%s2] sm:$0xff]
  %v802 = vld [vmem:[%s2 + $0x8] sm:$0xff]
  %v803 = vld [vmem:[%s2 + $0x10] sm:$0xff]
  %v804 = vld [vmem:[%s2 + $0x18] sm:$0xff]
  %v805 = vld [vmem:[%s2 + $0x20] sm:$0xff]
  %v806 = vld [vmem:[%s2 + $0x28] sm:$0xff]
  %v807 = vld [vmem:[%s2 + $0x30] sm:$0xff]
  %v808 = vld [vmem:[%s2 + $0x38] sm:$0xff]
  %v809 = vld [vmem:[%s2 + $0x40] sm:$0xff]
  %v810 = vld [vmem:[%s2 + $0x48] sm:$0xff]
  %v811 = vld [vmem:[%s2 + $0x50] sm:$0xff]
  %v812 = vld [vmem:[%s2 + $0x58] sm:$0xff]
  %v813 = vld [vmem:[%s2 + $0x60] sm:$0xff]
  %v814 = vld [vmem:[%s2 + $0x68] sm:$0xff]
  %v815 = vld [vmem:[%s2 + $0x70] sm:$0xff]
  %v816 = vld [vmem:[%s2 + $0x78] sm:$0xff]
  %v817 = vld [vmem:[%s3] sm:$0x1]
  %818 = vset.pattern.permute.xlu0 0
  %819 = vperm.xlu0 %818, %v801
  %v820 = vpop.permute.xlu0 %819
  %821 = vset.pattern.permute.xlu0 0
  %822 = vperm.xlu0 %821, %v802
  %v823 = vpop.permute.xlu0 %822
  %824 = vset.pattern.permute.xlu0 0
  %825 = vperm.xlu0 %824, %v803
  %v826 = vpop.permute.xlu0 %825
  %827 = vset.pattern.permute.xlu0 0
  %828 = vperm.xlu0 %827, %v804
  %v829 = vpop.permute.xlu0 %828
  %830 = vset.pattern.permute.xlu0 0
  %831 = vperm.xlu0 %830, %v805
  %v832 = vpop.permute.xlu0 %831
  %833 = vset.pattern.permute.xlu0 0
  %834 = vperm.xlu0 %833, %v806
  %v835 = vpop.permute.xlu0 %834
  %836 = vset.pattern.permute.xlu0 0
  %837 = vperm.xlu0 %836, %v807
  %v838 = vpop.permute.xlu0 %837
  %839 = vset.pattern.permute.xlu0 0
  %840 = vperm.xlu0 %839, %v808
  %v841 = vpop.permute.xlu0 %840
  %842 = vset.pattern.permute.xlu0 0
  %843 = vperm.xlu0 %842, %v809
  %v844 = vpop.permute.xlu0 %843
  %845 = vset.pattern.permute.xlu0 0
  %846 = vperm.xlu0 %845, %v810
  %v847 = vpop.permute.xlu0 %846
  %848 = vset.pattern.permute.xlu0 0
  %849 = vperm.xlu0 %848, %v811
  %v850 = vpop.permute.xlu0 %849
  %851 = vset.pattern.permute.xlu0 0
  %852 = vperm.xlu0 %851, %v812
  %v853 = vpop.permute.xlu0 %852
  %854 = vset.pattern.permute.xlu0 0
  %855 = vperm.xlu0 %854, %v813
  %v856 = vpop.permute.xlu0 %855
  %857 = vset.pattern.permute.xlu0 0
  %858 = vperm.xlu0 %857, %v814
  %v859 = vpop.permute.xlu0 %858
  %860 = vset.pattern.permute.xlu0 0
  %861 = vperm.xlu0 %860, %v815
  %v862 = vpop.permute.xlu0 %861
  %863 = vset.pattern.permute.xlu0 0
  %864 = vperm.xlu0 %863, %v816
  %v865 = vpop.permute.xlu0 %864
  %v866 = vperm.slane %v817, 0
  %vm867 = vcmp.eq.s32.totalorder %v820, %v866
  %vm868 = vcmp.eq.s32.totalorder %v823, %v866
  %vm869 = vcmp.eq.s32.totalorder %v826, %v866
  %vm870 = vcmp.eq.s32.totalorder %v829, %v866
  %vm871 = vcmp.eq.s32.totalorder %v832, %v866
  %vm872 = vcmp.eq.s32.totalorder %v835, %v866
  %vm873 = vcmp.eq.s32.totalorder %v838, %v866
  %vm874 = vcmp.eq.s32.totalorder %v841, %v866
  %vm875 = vcmp.eq.s32.totalorder %v844, %v866
  %vm876 = vcmp.eq.s32.totalorder %v847, %v866
  %vm877 = vcmp.eq.s32.totalorder %v850, %v866
  %vm878 = vcmp.eq.s32.totalorder %v853, %v866
  %vm879 = vcmp.eq.s32.totalorder %v856, %v866
  %vm880 = vcmp.eq.s32.totalorder %v859, %v866
  %vm881 = vcmp.eq.s32.totalorder %v862, %v866
  %vm882 = vcmp.eq.s32.totalorder %v865, %v866
  %vm883 = vmand %vm400, %vm867
  %vm884 = vmand %vm401, %vm868
  %vm885 = vmand %vm402, %vm869
  %vm886 = vmand %vm403, %vm870
  %vm887 = vmand %vm404, %vm871
  %vm888 = vmand %vm405, %vm872
  %vm889 = vmand %vm406, %vm873
  %vm890 = vmand %vm407, %vm874
  %vm891 = vmand %vm408, %vm875
  %vm892 = vmand %vm409, %vm876
  %vm893 = vmand %vm410, %vm877
  %vm894 = vmand %vm411, %vm878
  %vm895 = vmand %vm412, %vm879
  %vm896 = vmand %vm413, %vm880
  %vm897 = vmand %vm414, %vm881
  %vm898 = vmand %vm415, %vm882
  %v899 = vsel %vm883, 1.0, 0.0
  %v900 = vsel %vm884, 1.0, 0.0
  %v901 = vsel %vm885, 1.0, 0.0
  %v902 = vsel %vm886, 1.0, 0.0
  %v903 = vsel %vm887, 1.0, 0.0
  %v904 = vsel %vm888, 1.0, 0.0
  %v905 = vsel %vm889, 1.0, 0.0
  %v906 = vsel %vm890, 1.0, 0.0
  %v907 = vsel %vm891, 1.0, 0.0
  %v908 = vsel %vm892, 1.0, 0.0
  %v909 = vsel %vm893, 1.0, 0.0
  %v910 = vsel %vm894, 1.0, 0.0
  %v911 = vsel %vm895, 1.0, 0.0
  %v912 = vsel %vm896, 1.0, 0.0
  %v913 = vsel %vm897, 1.0, 0.0
  %v914 = vsel %vm898, 1.0, 0.0
  %v915 = vld [vmem:[#allocation5] sm:$0xff]
  %v916 = vld [vmem:[#allocation5 + $0x8] sm:$0xff]
  %v917 = vld [vmem:[#allocation5 + $0x10] sm:$0xff]
  %v918 = vld [vmem:[#allocation5 + $0x18] sm:$0xff]
  %v919 = vld [vmem:[#allocation5 + $0x20] sm:$0xff]
  %v920 = vld [vmem:[#allocation5 + $0x28] sm:$0xff]
  %v921 = vld [vmem:[#allocation5 + $0x30] sm:$0xff]
  %v922 = vld [vmem:[#allocation5 + $0x38] sm:$0xff]
  %v923 = vld [vmem:[#allocation5 + $0x40] sm:$0xff]
  %v924 = vld [vmem:[#allocation5 + $0x48] sm:$0xff]
  %v925 = vld [vmem:[#allocation5 + $0x50] sm:$0xff]
  %v926 = vld [vmem:[#allocation5 + $0x58] sm:$0xff]
  %v927 = vld [vmem:[#allocation5 + $0x60] sm:$0xff]
  %v928 = vld [vmem:[#allocation5 + $0x68] sm:$0xff]
  %v929 = vld [vmem:[#allocation5 + $0x70] sm:$0xff]
  %v930 = vld [vmem:[#allocation5 + $0x78] sm:$0xff]
  %v931 = vmul.f32 %v899, %v304
  %v932 = vmul.f32 %v900, %v306
  %v933 = vmul.f32 %v901, %v309
  %v934 = vmul.f32 %v902, %v311
  %v935 = vmul.f32 %v903, %v314
  %v936 = vmul.f32 %v904, %v316
  %v937 = vmul.f32 %v905, %v319
  %v938 = vmul.f32 %v906, %v321
  %v939 = vmul.f32 %v907, %v324
  %v940 = vmul.f32 %v908, %v326
  %v941 = vmul.f32 %v909, %v329
  %v942 = vmul.f32 %v910, %v331
  %v943 = vmul.f32 %v911, %v334
  %v944 = vmul.f32 %v912, %v336
  %v945 = vmul.f32 %v913, %v339
  %v946 = vmul.f32 %v914, %v341
  %947 = vadd.xlane.f32.xlu0 %v931
  %v948 = vpop.xlane.xlu0 %947
  %949 = vadd.xlane.f32.xlu0 %v932
  %v950 = vpop.xlane.xlu0 %949
  %951 = vadd.xlane.f32.xlu0 %v933
  %v952 = vpop.xlane.xlu0 %951
  %953 = vadd.xlane.f32.xlu0 %v934
  %v954 = vpop.xlane.xlu0 %953
  %955 = vadd.xlane.f32.xlu0 %v935
  %v956 = vpop.xlane.xlu0 %955
  %957 = vadd.xlane.f32.xlu0 %v936
  %v958 = vpop.xlane.xlu0 %957
  %959 = vadd.xlane.f32.xlu0 %v937
  %v960 = vpop.xlane.xlu0 %959
  %961 = vadd.xlane.f32.xlu0 %v938
  %v962 = vpop.xlane.xlu0 %961
  %963 = vadd.xlane.f32.xlu0 %v939
  %v964 = vpop.xlane.xlu0 %963
  %965 = vadd.xlane.f32.xlu0 %v940
  %v966 = vpop.xlane.xlu0 %965
  %967 = vadd.xlane.f32.xlu0 %v941
  %v968 = vpop.xlane.xlu0 %967
  %969 = vadd.xlane.f32.xlu0 %v942
  %v970 = vpop.xlane.xlu0 %969
  %971 = vadd.xlane.f32.xlu0 %v943
  %v972 = vpop.xlane.xlu0 %971
  %973 = vadd.xlane.f32.xlu0 %v944
  %v974 = vpop.xlane.xlu0 %973
  %975 = vadd.xlane.f32.xlu0 %v945
  %v976 = vpop.xlane.xlu0 %975
  %977 = vadd.xlane.f32.xlu0 %v946
  %v978 = vpop.xlane.xlu0 %977
  %v979 = vadd.f32 %v915, %v948
  %v980 = vadd.f32 %v916, %v950
  %v981 = vadd.f32 %v917, %v952
  %v982 = vadd.f32 %v918, %v954
  %v983 = vadd.f32 %v919, %v956
  %v984 = vadd.f32 %v920, %v958
  %v985 = vadd.f32 %v921, %v960
  %v986 = vadd.f32 %v922, %v962
  %v987 = vadd.f32 %v923, %v964
  %v988 = vadd.f32 %v924, %v966
  %v989 = vadd.f32 %v925, %v968
  %v990 = vadd.f32 %v926, %v970
  %v991 = vadd.f32 %v927, %v972
  %v992 = vadd.f32 %v928, %v974
  %v993 = vadd.f32 %v929, %v976
  %v994 = vadd.f32 %v930, %v978
  %995 = vst.msk [vmem:[#allocation5] sm:$0xff] %vm768, %v979
  %996 = vst.msk [vmem:[#allocation5 + $0x8] sm:$0xff] %vm768, %v980
  %997 = vst.msk [vmem:[#allocation5 + $0x10] sm:$0xff] %vm768, %v981
  %998 = vst.msk [vmem:[#allocation5 + $0x18] sm:$0xff] %vm768, %v982
  %999 = vst.msk [vmem:[#allocation5 + $0x20] sm:$0xff] %vm768, %v983
  %1000 = vst.msk [vmem:[#allocation5 + $0x28] sm:$0xff] %vm768, %v984
  %1001 = vst.msk [vmem:[#allocation5 + $0x30] sm:$0xff] %vm768, %v985
  %1002 = vst.msk [vmem:[#allocation5 + $0x38] sm:$0xff] %vm768, %v986
  %1003 = vst.msk [vmem:[#allocation5 + $0x40] sm:$0xff] %vm768, %v987
  %1004 = vst.msk [vmem:[#allocation5 + $0x48] sm:$0xff] %vm768, %v988
  %1005 = vst.msk [vmem:[#allocation5 + $0x50] sm:$0xff] %vm768, %v989
  %1006 = vst.msk [vmem:[#allocation5 + $0x58] sm:$0xff] %vm768, %v990
  %1007 = vst.msk [vmem:[#allocation5 + $0x60] sm:$0xff] %vm768, %v991
  %1008 = vst.msk [vmem:[#allocation5 + $0x68] sm:$0xff] %vm768, %v992
  %1009 = vst.msk [vmem:[#allocation5 + $0x70] sm:$0xff] %vm768, %v993
  %1010 = vst.msk [vmem:[#allocation5 + $0x78] sm:$0xff] %vm768, %v994
  %v1011 = vld [vmem:[#allocation6] sm:$0xff]
  %v1012 = vld [vmem:[#allocation6 + $0x8] sm:$0xff]
  %v1013 = vld [vmem:[#allocation6 + $0x10] sm:$0xff]
  %v1014 = vld [vmem:[#allocation6 + $0x18] sm:$0xff]
  %v1015 = vld [vmem:[#allocation6 + $0x20] sm:$0xff]
  %v1016 = vld [vmem:[#allocation6 + $0x28] sm:$0xff]
  %v1017 = vld [vmem:[#allocation6 + $0x30] sm:$0xff]
  %v1018 = vld [vmem:[#allocation6 + $0x38] sm:$0xff]
  %v1019 = vld [vmem:[#allocation6 + $0x40] sm:$0xff]
  %v1020 = vld [vmem:[#allocation6 + $0x48] sm:$0xff]
  %v1021 = vld [vmem:[#allocation6 + $0x50] sm:$0xff]
  %v1022 = vld [vmem:[#allocation6 + $0x58] sm:$0xff]
  %v1023 = vld [vmem:[#allocation6 + $0x60] sm:$0xff]
  %v1024 = vld [vmem:[#allocation6 + $0x68] sm:$0xff]
  %v1025 = vld [vmem:[#allocation6 + $0x70] sm:$0xff]
  %v1026 = vld [vmem:[#allocation6 + $0x78] sm:$0xff]
  %1027 = vadd.xlane.f32.xlu0 %v899
  %v1028 = vpop.xlane.xlu0 %1027
  %1029 = vadd.xlane.f32.xlu0 %v900
  %v1030 = vpop.xlane.xlu0 %1029
  %1031 = vadd.xlane.f32.xlu0 %v901
  %v1032 = vpop.xlane.xlu0 %1031
  %1033 = vadd.xlane.f32.xlu0 %v902
  %v1034 = vpop.xlane.xlu0 %1033
  %1035 = vadd.xlane.f32.xlu0 %v903
  %v1036 = vpop.xlane.xlu0 %1035
  %1037 = vadd.xlane.f32.xlu0 %v904
  %v1038 = vpop.xlane.xlu0 %1037
  %1039 = vadd.xlane.f32.xlu0 %v905
  %v1040 = vpop.xlane.xlu0 %1039
  %1041 = vadd.xlane.f32.xlu0 %v906
  %v1042 = vpop.xlane.xlu0 %1041
  %1043 = vadd.xlane.f32.xlu0 %v907
  %v1044 = vpop.xlane.xlu0 %1043
  %1045 = vadd.xlane.f32.xlu0 %v908
  %v1046 = vpop.xlane.xlu0 %1045
  %1047 = vadd.xlane.f32.xlu0 %v909
  %v1048 = vpop.xlane.xlu0 %1047
  %1049 = vadd.xlane.f32.xlu0 %v910
  %v1050 = vpop.xlane.xlu0 %1049
  %1051 = vadd.xlane.f32.xlu0 %v911
  %v1052 = vpop.xlane.xlu0 %1051
  %1053 = vadd.xlane.f32.xlu0 %v912
  %v1054 = vpop.xlane.xlu0 %1053
  %1055 = vadd.xlane.f32.xlu0 %v913
  %v1056 = vpop.xlane.xlu0 %1055
  %1057 = vadd.xlane.f32.xlu0 %v914
  %v1058 = vpop.xlane.xlu0 %1057
  %v1059 = vadd.f32 %v1011, %v1028
  %v1060 = vadd.f32 %v1012, %v1030
  %v1061 = vadd.f32 %v1013, %v1032
  %v1062 = vadd.f32 %v1014, %v1034
  %v1063 = vadd.f32 %v1015, %v1036
  %v1064 = vadd.f32 %v1016, %v1038
  %v1065 = vadd.f32 %v1017, %v1040
  %v1066 = vadd.f32 %v1018, %v1042
  %v1067 = vadd.f32 %v1019, %v1044
  %v1068 = vadd.f32 %v1020, %v1046
  %v1069 = vadd.f32 %v1021, %v1048
  %v1070 = vadd.f32 %v1022, %v1050
  %v1071 = vadd.f32 %v1023, %v1052
  %v1072 = vadd.f32 %v1024, %v1054
  %v1073 = vadd.f32 %v1025, %v1056
  %v1074 = vadd.f32 %v1026, %v1058
  %1075 = vst.msk [vmem:[#allocation6] sm:$0xff] %vm768, %v1059
  %1076 = vst.msk [vmem:[#allocation6 + $0x8] sm:$0xff] %vm768, %v1060
  %1077 = vst.msk [vmem:[#allocation6 + $0x10] sm:$0xff] %vm768, %v1061
  %1078 = vst.msk [vmem:[#allocation6 + $0x18] sm:$0xff] %vm768, %v1062
  %1079 = vst.msk [vmem:[#allocation6 + $0x20] sm:$0xff] %vm768, %v1063
  %1080 = vst.msk [vmem:[#allocation6 + $0x28] sm:$0xff] %vm768, %v1064
  %1081 = vst.msk [vmem:[#allocation6 + $0x30] sm:$0xff] %vm768, %v1065
  %1082 = vst.msk [vmem:[#allocation6 + $0x38] sm:$0xff] %vm768, %v1066
  %1083 = vst.msk [vmem:[#allocation6 + $0x40] sm:$0xff] %vm768, %v1067
  %1084 = vst.msk [vmem:[#allocation6 + $0x48] sm:$0xff] %vm768, %v1068
  %1085 = vst.msk [vmem:[#allocation6 + $0x50] sm:$0xff] %vm768, %v1069
  %1086 = vst.msk [vmem:[#allocation6 + $0x58] sm:$0xff] %vm768, %v1070
  %1087 = vst.msk [vmem:[#allocation6 + $0x60] sm:$0xff] %vm768, %v1071
  %1088 = vst.msk [vmem:[#allocation6 + $0x68] sm:$0xff] %vm768, %v1072
  %1089 = vst.msk [vmem:[#allocation6 + $0x70] sm:$0xff] %vm768, %v1073
  %1090 = vst.msk [vmem:[#allocation6 + $0x78] sm:$0xff] %vm768, %v1074
  // Predicated region
  $region22: #{tpu_custom_call.1} parent=0 // pred_check
    %p1091 = pneg %p17
  $region23: #{tpu_custom_call.1} parent=0 // pred_check_branch
    %1093 = sbr.rel (%p1091) target = $region25
  $region24: #{tpu_custom_call.1} parent=0 // pred_region
    %vm1094 = vcmp.lt.s32.totalorder %v362, 8
    %vm1095 = vcmp.lt.s32.totalorder %v363, 8
    %vm1096 = vcmp.lt.s32.totalorder %v364, 8
    %vm1097 = vcmp.lt.s32.totalorder %v365, 8
    %vm1098 = vcmp.lt.s32.totalorder %v366, 8
    %vm1099 = vcmp.lt.s32.totalorder %v367, 8
    %vm1100 = vcmp.lt.s32.totalorder %v368, 8
    %vm1101 = vcmp.lt.s32.totalorder %v369, 8
    %vm1102 = vcmp.lt.s32.totalorder %v370, 8
    %vm1103 = vcmp.lt.s32.totalorder %v371, 8
    %vm1104 = vcmp.lt.s32.totalorder %v372, 8
    %vm1105 = vcmp.lt.s32.totalorder %v373, 8
    %vm1106 = vcmp.lt.s32.totalorder %v374, 8
    %vm1107 = vcmp.lt.s32.totalorder %v375, 8
    %vm1108 = vcmp.lt.s32.totalorder %v376, 8
    %vm1109 = vcmp.lt.s32.totalorder %v377, 8
    %v1110 = vld [vmem:[#allocation6] sm:$0xff]
    %v1111 = vld [vmem:[#allocation6 + $0x8] sm:$0xff]
    %v1112 = vld [vmem:[#allocation6 + $0x10] sm:$0xff]
    %v1113 = vld [vmem:[#allocation6 + $0x18] sm:$0xff]
    %v1114 = vld [vmem:[#allocation6 + $0x20] sm:$0xff]
    %v1115 = vld [vmem:[#allocation6 + $0x28] sm:$0xff]
    %v1116 = vld [vmem:[#allocation6 + $0x30] sm:$0xff]
    %v1117 = vld [vmem:[#allocation6 + $0x38] sm:$0xff]
    %v1118 = vld [vmem:[#allocation6 + $0x40] sm:$0xff]
    %v1119 = vld [vmem:[#allocation6 + $0x48] sm:$0xff]
    %v1120 = vld [vmem:[#allocation6 + $0x50] sm:$0xff]
    %v1121 = vld [vmem:[#allocation6 + $0x58] sm:$0xff]
    %v1122 = vld [vmem:[#allocation6 + $0x60] sm:$0xff]
    %v1123 = vld [vmem:[#allocation6 + $0x68] sm:$0xff]
    %v1124 = vld [vmem:[#allocation6 + $0x70] sm:$0xff]
    %v1125 = vld [vmem:[#allocation6 + $0x78] sm:$0xff]
    %v1126 = vsel %vm1094, %v1110, 1.0
    %v1127 = vsel %vm1095, %v1111, 1.0
    %v1128 = vsel %vm1096, %v1112, 1.0
    %v1129 = vsel %vm1097, %v1113, 1.0
    %v1130 = vsel %vm1098, %v1114, 1.0
    %v1131 = vsel %vm1099, %v1115, 1.0
    %v1132 = vsel %vm1100, %v1116, 1.0
    %v1133 = vsel %vm1101, %v1117, 1.0
    %v1134 = vsel %vm1102, %v1118, 1.0
    %v1135 = vsel %vm1103, %v1119, 1.0
    %v1136 = vsel %vm1104, %v1120, 1.0
    %v1137 = vsel %vm1105, %v1121, 1.0
    %v1138 = vsel %vm1106, %v1122, 1.0
    %v1139 = vsel %vm1107, %v1123, 1.0
    %v1140 = vsel %vm1108, %v1124, 1.0
    %v1141 = vsel %vm1109, %v1125, 1.0
    %v1142 = vld [vmem:[#allocation5] sm:$0xff]
    %v1143 = vld [vmem:[#allocation5 + $0x8] sm:$0xff]
    %v1144 = vld [vmem:[#allocation5 + $0x10] sm:$0xff]
    %v1145 = vld [vmem:[#allocation5 + $0x18] sm:$0xff]
    %v1146 = vld [vmem:[#allocation5 + $0x20] sm:$0xff]
    %v1147 = vld [vmem:[#allocation5 + $0x28] sm:$0xff]
    %v1148 = vld [vmem:[#allocation5 + $0x30] sm:$0xff]
    %v1149 = vld [vmem:[#allocation5 + $0x38] sm:$0xff]
    %v1150 = vld [vmem:[#allocation5 + $0x40] sm:$0xff]
    %v1151 = vld [vmem:[#allocation5 + $0x48] sm:$0xff]
    %v1152 = vld [vmem:[#allocation5 + $0x50] sm:$0xff]
    %v1153 = vld [vmem:[#allocation5 + $0x58] sm:$0xff]
    %v1154 = vld [vmem:[#allocation5 + $0x60] sm:$0xff]
    %v1155 = vld [vmem:[#allocation5 + $0x68] sm:$0xff]
    %v1156 = vld [vmem:[#allocation5 + $0x70] sm:$0xff]
    %v1157 = vld [vmem:[#allocation5 + $0x78] sm:$0xff]
    %v1158 = vrcp.pop %v1126
    %v1159 = vrcp.pop %v1127
    %v1160 = vrcp.pop %v1128
    %v1161 = vrcp.pop %v1129
    %v1162 = vrcp.pop %v1130
    %v1163 = vrcp.pop %v1131
    %v1164 = vrcp.pop %v1132
    %v1165 = vrcp.pop %v1133
    %v1166 = vrcp.pop %v1134
    %v1167 = vrcp.pop %v1135
    %v1168 = vrcp.pop %v1136
    %v1169 = vrcp.pop %v1137
    %v1170 = vrcp.pop %v1138
    %v1171 = vrcp.pop %v1139
    %v1172 = vrcp.pop %v1140
    %v1173 = vrcp.pop %v1141
    %v1174 = vmul.f32 %v1142, %v1158
    %v1175 = vmul.f32 %v1143, %v1159
    %v1176 = vmul.f32 %v1144, %v1160
    %v1177 = vmul.f32 %v1145, %v1161
    %v1178 = vmul.f32 %v1146, %v1162
    %v1179 = vmul.f32 %v1147, %v1163
    %v1180 = vmul.f32 %v1148, %v1164
    %v1181 = vmul.f32 %v1149, %v1165
    %v1182 = vmul.f32 %v1150, %v1166
    %v1183 = vmul.f32 %v1151, %v1167
    %v1184 = vmul.f32 %v1152, %v1168
    %v1185 = vmul.f32 %v1153, %v1169
    %v1186 = vmul.f32 %v1154, %v1170
    %v1187 = vmul.f32 %v1155, %v1171
    %v1188 = vmul.f32 %v1156, %v1172
    %v1189 = vmul.f32 %v1157, %v1173
    %v1190 = vld [vmem:[#allocation3] sm:$0xff]
    %v1191 = vld [vmem:[#allocation3 + $0x8] sm:$0xff]
    %v1192 = vld [vmem:[#allocation3 + $0x10] sm:$0xff]
    %v1193 = vld [vmem:[#allocation3 + $0x18] sm:$0xff]
    %v1194 = vld [vmem:[#allocation3 + $0x20] sm:$0xff]
    %v1195 = vld [vmem:[#allocation3 + $0x28] sm:$0xff]
    %v1196 = vld [vmem:[#allocation3 + $0x30] sm:$0xff]
    %v1197 = vld [vmem:[#allocation3 + $0x38] sm:$0xff]
    %v1198 = vld [vmem:[#allocation3 + $0x40] sm:$0xff]
    %v1199 = vld [vmem:[#allocation3 + $0x48] sm:$0xff]
    %v1200 = vld [vmem:[#allocation3 + $0x50] sm:$0xff]
    %v1201 = vld [vmem:[#allocation3 + $0x58] sm:$0xff]
    %v1202 = vld [vmem:[#allocation3 + $0x60] sm:$0xff]
    %v1203 = vld [vmem:[#allocation3 + $0x68] sm:$0xff]
    %v1204 = vld [vmem:[#allocation3 + $0x70] sm:$0xff]
    %v1205 = vld [vmem:[#allocation3 + $0x78] sm:$0xff]
    %v1206 = vsub.f32 %v1174, %v1190
    %v1207 = vsub.f32 %v1175, %v1191
    %v1208 = vsub.f32 %v1176, %v1192
    %v1209 = vsub.f32 %v1177, %v1193
    %v1210 = vsub.f32 %v1178, %v1194
    %v1211 = vsub.f32 %v1179, %v1195
    %v1212 = vsub.f32 %v1180, %v1196
    %v1213 = vsub.f32 %v1181, %v1197
    %v1214 = vsub.f32 %v1182, %v1198
    %v1215 = vsub.f32 %v1183, %v1199
    %v1216 = vsub.f32 %v1184, %v1200
    %v1217 = vsub.f32 %v1185, %v1201
    %v1218 = vsub.f32 %v1186, %v1202
    %v1219 = vsub.f32 %v1187, %v1203
    %v1220 = vsub.f32 %v1188, %v1204
    %v1221 = vsub.f32 %v1189, %v1205
    %v1222 = vld [vmem:[#allocation4] sm:$0xff]
    %v1223 = vld [vmem:[#allocation4 + $0x8] sm:$0xff]
    %v1224 = vld [vmem:[#allocation4 + $0x10] sm:$0xff]
    %v1225 = vld [vmem:[#allocation4 + $0x18] sm:$0xff]
    %v1226 = vld [vmem:[#allocation4 + $0x20] sm:$0xff]
    %v1227 = vld [vmem:[#allocation4 + $0x28] sm:$0xff]
    %v1228 = vld [vmem:[#allocation4 + $0x30] sm:$0xff]
    %v1229 = vld [vmem:[#allocation4 + $0x38] sm:$0xff]
    %v1230 = vld [vmem:[#allocation4 + $0x40] sm:$0xff]
    %v1231 = vld [vmem:[#allocation4 + $0x48] sm:$0xff]
    %v1232 = vld [vmem:[#allocation4 + $0x50] sm:$0xff]
    %v1233 = vld [vmem:[#allocation4 + $0x58] sm:$0xff]
    %v1234 = vld [vmem:[#allocation4 + $0x60] sm:$0xff]
    %v1235 = vld [vmem:[#allocation4 + $0x68] sm:$0xff]
    %v1236 = vld [vmem:[#allocation4 + $0x70] sm:$0xff]
    %v1237 = vld [vmem:[#allocation4 + $0x78] sm:$0xff]
    %v1238 = vlog2.pop %v1222
    %v1239 = vmul.f32 %v1238, 0.6931472
    %v1240 = vlog2.pop %v1223
    %v1241 = vmul.f32 %v1240, 0.6931472
    %v1242 = vlog2.pop %v1224
    %v1243 = vmul.f32 %v1242, 0.6931472
    %v1244 = vlog2.pop %v1225
    %v1245 = vmul.f32 %v1244, 0.6931472
    %v1246 = vlog2.pop %v1226
    %v1247 = vmul.f32 %v1246, 0.6931472
    %v1248 = vlog2.pop %v1227
    %v1249 = vmul.f32 %v1248, 0.6931472
    %v1250 = vlog2.pop %v1228
    %v1251 = vmul.f32 %v1250, 0.6931472
    %v1252 = vlog2.pop %v1229
    %v1253 = vmul.f32 %v1252, 0.6931472
    %v1254 = vlog2.pop %v1230
    %v1255 = vmul.f32 %v1254, 0.6931472
    %v1256 = vlog2.pop %v1231
    %v1257 = vmul.f32 %v1256, 0.6931472
    %v1258 = vlog2.pop %v1232
    %v1259 = vmul.f32 %v1258, 0.6931472
    %v1260 = vlog2.pop %v1233
    %v1261 = vmul.f32 %v1260, 0.6931472
    %v1262 = vlog2.pop %v1234
    %v1263 = vmul.f32 %v1262, 0.6931472
    %v1264 = vlog2.pop %v1235
    %v1265 = vmul.f32 %v1264, 0.6931472
    %v1266 = vlog2.pop %v1236
    %v1267 = vmul.f32 %v1266, 0.6931472
    %v1268 = vlog2.pop %v1237
    %v1269 = vmul.f32 %v1268, 0.6931472
    %v1270 = vsub.f32 %v1206, %v1239
    %v1271 = vsub.f32 %v1207, %v1241
    %v1272 = vsub.f32 %v1208, %v1243
    %v1273 = vsub.f32 %v1209, %v1245
    %v1274 = vsub.f32 %v1210, %v1247
    %v1275 = vsub.f32 %v1211, %v1249
    %v1276 = vsub.f32 %v1212, %v1251
    %v1277 = vsub.f32 %v1213, %v1253
    %v1278 = vsub.f32 %v1214, %v1255
    %v1279 = vsub.f32 %v1215, %v1257
    %v1280 = vsub.f32 %v1216, %v1259
    %v1281 = vsub.f32 %v1217, %v1261
    %v1282 = vsub.f32 %v1218, %v1263
    %v1283 = vsub.f32 %v1219, %v1265
    %v1284 = vsub.f32 %v1220, %v1267
    %v1285 = vsub.f32 %v1221, %v1269
    %v1286 = vmul.f32 %v1270, -1.0
    %v1287 = vmul.f32 %v1271, -1.0
    %v1288 = vmul.f32 %v1272, -1.0
    %v1289 = vmul.f32 %v1273, -1.0
    %v1290 = vmul.f32 %v1274, -1.0
    %v1291 = vmul.f32 %v1275, -1.0
    %v1292 = vmul.f32 %v1276, -1.0
    %v1293 = vmul.f32 %v1277, -1.0
    %v1294 = vmul.f32 %v1278, -1.0
    %v1295 = vmul.f32 %v1279, -1.0
    %v1296 = vmul.f32 %v1280, -1.0
    %v1297 = vmul.f32 %v1281, -1.0
    %v1298 = vmul.f32 %v1282, -1.0
    %v1299 = vmul.f32 %v1283, -1.0
    %v1300 = vmul.f32 %v1284, -1.0
    %v1301 = vmul.f32 %v1285, -1.0
    %v1302 = vsel %vm1094, %v1286, 0.0
    %v1303 = vsel %vm1095, %v1287, 0.0
    %v1304 = vsel %vm1096, %v1288, 0.0
    %v1305 = vsel %vm1097, %v1289, 0.0
    %v1306 = vsel %vm1098, %v1290, 0.0
    %v1307 = vsel %vm1099, %v1291, 0.0
    %v1308 = vsel %vm1100, %v1292, 0.0
    %v1309 = vsel %vm1101, %v1293, 0.0
    %v1310 = vsel %vm1102, %v1294, 0.0
    %v1311 = vsel %vm1103, %v1295, 0.0
    %v1312 = vsel %vm1104, %v1296, 0.0
    %v1313 = vsel %vm1105, %v1297, 0.0
    %v1314 = vsel %vm1106, %v1298, 0.0
    %v1315 = vsel %vm1107, %v1299, 0.0
    %v1316 = vsel %vm1108, %v1300, 0.0
    %v1317 = vsel %vm1109, %v1301, 0.0
    %1318 = vst.msk [vmem:[%s4] sm:$0xff] %vm768, %v1302
    %1319 = vst.msk [vmem:[%s4 + $0x8] sm:$0xff] %vm768, %v1303
    %1320 = vst.msk [vmem:[%s4 + $0x10] sm:$0xff] %vm768, %v1304
    %1321 = vst.msk [vmem:[%s4 + $0x18] sm:$0xff] %vm768, %v1305
    %1322 = vst.msk [vmem:[%s4 + $0x20] sm:$0xff] %vm768, %v1306
    %1323 = vst.msk [vmem:[%s4 + $0x28] sm:$0xff] %vm768, %v1307
    %1324 = vst.msk [vmem:[%s4 + $0x30] sm:$0xff] %vm768, %v1308
    %1325 = vst.msk [vmem:[%s4 + $0x38] sm:$0xff] %vm768, %v1309
    %1326 = vst.msk [vmem:[%s4 + $0x40] sm:$0xff] %vm768, %v1310
    %1327 = vst.msk [vmem:[%s4 + $0x48] sm:$0xff] %vm768, %v1311
    %1328 = vst.msk [vmem:[%s4 + $0x50] sm:$0xff] %vm768, %v1312
    %1329 = vst.msk [vmem:[%s4 + $0x58] sm:$0xff] %vm768, %v1313
    %1330 = vst.msk [vmem:[%s4 + $0x60] sm:$0xff] %vm768, %v1314
    %1331 = vst.msk [vmem:[%s4 + $0x68] sm:$0xff] %vm768, %v1315
    %1332 = vst.msk [vmem:[%s4 + $0x70] sm:$0xff] %vm768, %v1316
    %1333 = vst.msk [vmem:[%s4 + $0x78] sm:$0xff] %vm768, %v1317
  $region25: #{tpu_custom_call.1} parent=0 // pred_fallthru
    _
  // Predicated region
  $region26: #{tpu_custom_call.1} parent=0 // pred_check
    _
  $region27: #{tpu_custom_call.1} parent=0 // pred_check_branch
    %1335 = sbr.rel (0) target = $region29
  $region28: #{tpu_custom_call.1} parent=0 // pred_region
    _
  $region29: #{tpu_custom_call.1} parent=0 // pred_fallthru
    _
  // Predicated region
  $region30: #{tpu_custom_call.1} parent=0 // pred_check
    _
  $region31: #{tpu_custom_call.1} parent=0 // pred_check_branch
    %1337 = sbr.rel (0) target = $region33
  $region32: #{tpu_custom_call.1} parent=0 // pred_region
    _
  $region33: #{tpu_custom_call.1} parent=0 // pred_fallthru
    _

</llo_original>
